<compile_context>
chip_gen: v5e
topology: v5e:2x2
jax: 0.10.0
libtpu: 0.0.40
codegen_flags: <defaults>
</compile_context>

<pallas_src>
import jax
import jax.numpy as jnp
from jax import lax
from jax.experimental import pallas as pl
from jax.experimental.pallas import tpu as pltpu

_BN_EPS = 1e-5
_LANE = 128


def _basic_block_kernel(xp_ref, w1_ref, w2_ref, b_ref, o_ref, mid_ref):
    """Fused conv3x3+BN+ReLU + conv3x3+BN + residual + ReLU for one row strip.

    xp_ref : (1, H+4, W+2, Cp)  zero-padded input (full image for batch n)
    w1_ref : (9*Cp, Cp)         conv1 weights, BN1 scale folded, im2col layout
    w2_ref : (9*Cp, Cp)         conv2 weights, BN2 scale folded, im2col layout
    b_ref  : (2, Cp)            row 0: BN1 bias, row 1: BN2 bias
    o_ref  : (1, TH, W, Cp)     output row strip
    mid_ref: (TH+2, W+2, Cp)    scratch: W-padded relu(bn1(conv1)) strip + halo
    """
    _, TH, W, Cp = o_ref.shape
    h = pl.program_id(1)
    row0 = pl.multiple_of(h * TH, TH)       # first padded-input row of strip

    # ---- conv1 (+ folded BN1 scale) as ONE deep matmul over all 9 taps ----
    # Evaluated for TH+2 rows (strip plus one halo row above/below, needed by
    # conv2).  M = (TH+2)*W, K = 9*Cp.
    taps1 = [
        xp_ref[0, pl.ds(row0 + dy, TH + 2), dx:dx + W, :]
        .reshape((TH + 2) * W, Cp)
        for dy in range(3) for dx in range(3)
    ]
    patch1 = jnp.concatenate(taps1, axis=-1)                       # (M, 9*Cp)
    out1 = jnp.dot(patch1, w1_ref[...], preferred_element_type=jnp.float32)
    out1 = jnp.maximum(out1 + b_ref[0:1, :], 0.0)                  # bn1 bias+relu
    out1 = out1.reshape(TH + 2, W, Cp)

    # Stage into the W-padded scratch.  Only the two halo columns need zeroing
    # (every interior element is overwritten each step).
    zcol = jnp.zeros((TH + 2, 1, Cp), jnp.float32)
    mid_ref[:, 0:1, :] = zcol
    mid_ref[:, W + 1:W + 2, :] = zcol
    mid_ref[:, 1:W + 1, :] = out1

    # Halo rows outside the image must contribute zeros to conv2 (its spatial
    # padding).  Only the very first / very last strip can have such rows, so
    # gate the (cheap) single-row zero stores instead of masking the whole
    # tensor every step.
    zrow = jnp.zeros((1, W + 2, Cp), jnp.float32)

    @pl.when(h == 0)
    def _():
        mid_ref[0:1, :, :] = zrow                 # conv1 output at image row -1

    @pl.when(h == pl.num_programs(1) - 1)
    def _():
        mid_ref[TH + 1:TH + 2, :, :] = zrow       # conv1 output at image row H

    # ---- conv2 (+ folded BN2 scale) as ONE deep matmul ----
    taps2 = [
        mid_ref[dy:dy + TH, dx:dx + W, :].reshape(TH * W, Cp)
        for dy in range(3) for dx in range(3)
    ]
    patch2 = jnp.concatenate(taps2, axis=-1)                       # (TH*W, 9*Cp)
    out2 = jnp.dot(patch2, w2_ref[...], preferred_element_type=jnp.float32)
    out2 = out2 + b_ref[1:2, :]                                    # bn2 bias

    # Residual straight from the resident input tile (valid because Cin==C,
    # stride==1 and downsample is None), then final ReLU.
    identity = xp_ref[0, pl.ds(row0 + 2, TH), 1:W + 1, :].reshape(TH * W, Cp)
    o_ref[0] = jnp.maximum(out2 + identity, 0.0).reshape(TH, W, Cp)


def basic_block_forward(x_nchw, params, tile_h=8):
    """Runs the fused BasicBlock kernel.  Input/output layout: NCHW (PyTorch)."""
    x = jnp.transpose(x_nchw, (0, 2, 3, 1)).astype(jnp.float32)    # NHWC
    N, H, W, C = x.shape
    Cp = ((C + _LANE - 1) // _LANE) * _LANE                        # lane-dense C

    # Fold BN (inference form) into per-output-channel scale/bias, then fold
    # the scale straight into the conv weights (one-time wrapper-side cost).
    s1 = params["gamma1"] / jnp.sqrt(params["var1"] + _BN_EPS)
    b1 = params["beta1"] - params["mean1"] * s1
    s2 = params["gamma2"] / jnp.sqrt(params["var2"] + _BN_EPS)
    b2 = params["beta2"] - params["mean2"] * s2

    w1 = params["w1"].astype(jnp.float32) * s1[None, None, None, :]
    w2 = params["w2"].astype(jnp.float32) * s2[None, None, None, :]
    w1p = jnp.zeros((3, 3, Cp, Cp), jnp.float32).at[:, :, :C, :C].set(w1)
    w2p = jnp.zeros((3, 3, Cp, Cp), jnp.float32).at[:, :, :C, :C].set(w2)
    w1m = w1p.reshape(9 * Cp, Cp)                                  # im2col layout
    w2m = w2p.reshape(9 * Cp, Cp)
    bias = (jnp.zeros((2, Cp), jnp.float32)
            .at[0, :C].set(b1.astype(jnp.float32))
            .at[1, :C].set(b2.astype(jnp.float32)))

    # Channel pad + spatial halo pad (H by 2 for the strip halo, W by 1) in a
    # single scatter.
    xp = (jnp.zeros((N, H + 4, W + 2, Cp), jnp.float32)
          .at[:, 2:H + 2, 1:W + 1, :C].set(x))

    TH = tile_h if (H % tile_h == 0) else H
    grid = (N, H // TH)

    out = pl.pallas_call(
        _basic_block_kernel,
        out_shape=jax.ShapeDtypeStruct((N, H, W, Cp), jnp.float32),
        grid=grid,
        in_specs=[
            pl.BlockSpec((1, H + 4, W + 2, Cp), lambda n, h: (n, 0, 0, 0)),
            pl.BlockSpec((9 * Cp, Cp), lambda n, h: (0, 0)),
            pl.BlockSpec((9 * Cp, Cp), lambda n, h: (0, 0)),
            pl.BlockSpec((2, Cp), lambda n, h: (0, 0)),
        ],
        out_specs=pl.BlockSpec((1, TH, W, Cp), lambda n, h: (n, h, 0, 0)),
        scratch_shapes=[pltpu.VMEM((TH + 2, W + 2, Cp), jnp.float32)],
        compiler_params=pltpu.CompilerParams(
            dimension_semantics=("parallel", "parallel"),
            vmem_limit_bytes=48 * 1024 * 1024),
    )(xp, w1m, w2m, bias)

    out = out[..., :C]                                             # drop channel pad
    return jnp.transpose(out, (0, 3, 1, 2))                        # back to NCHW


def _reference_forward(x_nchw, params):
    """Pure-JAX reference (lax.conv) for correctness checking."""
    x = jnp.transpose(x_nchw, (0, 2, 3, 1)).astype(jnp.float32)

    def conv(v, w):
        return lax.conv_general_dilated(
            v, w, window_strides=(1, 1), padding=((1, 1), (1, 1)),
            dimension_numbers=("NHWC", "HWIO", "NHWC"))

    o = conv(x, params["w1"])
    o = (o - params["mean1"]) / jnp.sqrt(params["var1"] + _BN_EPS) \
        * params["gamma1"] + params["beta1"]
    o = jnp.maximum(o, 0.0)
    o = conv(o, params["w2"])
    o = (o - params["mean2"]) / jnp.sqrt(params["var2"] + _BN_EPS) \
        * params["gamma2"] + params["beta2"]
    o = jnp.maximum(o + x, 0.0)
    return jnp.transpose(o, (0, 3, 1, 2))


if __name__ == "__main__":
    # Small shapes consistent with BasicBlock(inplanes=4, planes=4, stride=1).
    N, C, Hs, Ws = 2, 4, 16, 16

    key = jax.random.PRNGKey(0)
    ks = jax.random.split(key, 9)
    x = jax.random.normal(ks[0], (N, C, Hs, Ws), dtype=jnp.float32)

    params = {
        # conv weights stored HWIO (kh, kw, in, out)
        "w1": 0.1 * jax.random.normal(ks[1], (3, 3, C, C), dtype=jnp.float32),
        "w2": 0.1 * jax.random.normal(ks[2], (3, 3, C, C), dtype=jnp.float32),
        "gamma1": 1.0 + 0.1 * jax.random.normal(ks[3], (C,), dtype=jnp.float32),
        "beta1": 0.1 * jax.random.normal(ks[4], (C,), dtype=jnp.float32),
        "mean1": 0.1 * jax.random.normal(ks[5], (C,), dtype=jnp.float32),
        "var1": 0.5 + jax.random.uniform(ks[6], (C,), dtype=jnp.float32),
        "gamma2": 1.0 + 0.1 * jax.random.normal(ks[7], (C,), dtype=jnp.float32),
        "beta2": 0.1 * jax.random.normal(ks[8], (C,), dtype=jnp.float32),
        "mean2": jnp.zeros((C,), jnp.float32),
        "var2": jnp.ones((C,), jnp.float32),
    }
    # TODO(synk): PyTorch BatchNorm2d in train mode uses batch statistics;
    # this kernel implements the (deterministic) inference-mode affine form.

    out = jax.block_until_ready(basic_block_forward(x, params))
    ref = jax.block_until_ready(_reference_forward(x, params))

    assert out.shape == (N, C, Hs, Ws), out.shape
    assert jnp.allclose(out, ref, atol=1e-4, rtol=1e-4), \
        float(jnp.max(jnp.abs(out - ref)))
    print("KERNEL_OK")
</pallas_src>

<mosaic_0001>
module attributes {stable_mosaic.version = 11 : i64} {
  func.func @_basic_block_kernel(%arg0: i32, %arg1: i32, %arg2: memref<1x20x18x128xf32, #tpu.memory_space<vmem>>, %arg3: memref<1152x128xf32, #tpu.memory_space<vmem>>, %arg4: memref<1152x128xf32, #tpu.memory_space<vmem>>, %arg5: memref<2x128xf32, #tpu.memory_space<vmem>>, %arg6: memref<1x8x16x128xf32, #tpu.memory_space<vmem>>, %arg7: memref<10x18x128xf32, #tpu.memory_space<vmem>>) attributes {dimension_semantics = [#tpu.dimension_semantics<parallel>, #tpu.dimension_semantics<parallel>], iteration_bounds = array<i64: 2, 2>, scalar_prefetch = 0 : i64, scratch_operands = 1 : i64, tpu.core_type = #tpu.core_type<tc>, window_params = [{transform_indices = @transform_0, window_bounds = array<i64: 1, 20, 18, 128>}, {pipeline_mode = #tpu.pipeline_mode<synchronous>, transform_indices = @transform_1, window_bounds = array<i64: 1152, 128>}, {pipeline_mode = #tpu.pipeline_mode<synchronous>, transform_indices = @transform_2, window_bounds = array<i64: 1152, 128>}, {pipeline_mode = #tpu.pipeline_mode<synchronous>, transform_indices = @transform_3, window_bounds = array<i64: 2, 128>}, {transform_indices = @transform_4, window_bounds = array<i64: 1, 8, 16, 128>}]} {
    %c8_i32 = arith.constant 8 : i32
    %0 = arith.muli %arg1, %c8_i32 : i32
    %1 = tpu.assume_multiple %0, 8 : i32
    %c0_i32 = arith.constant 0 : i32
    %2 = arith.addi %1, %c0_i32 : i32
    %c0 = arith.constant 0 : index
    %3 = arith.index_cast %2 : i32 to index
    %c0_0 = arith.constant 0 : index
    %c0_1 = arith.constant 0 : index
    %4 = vector.load %arg2[%c0, %3, %c0_0, %c0_1] : memref<1x20x18x128xf32, #tpu.memory_space<vmem>>, vector<1x10x16x128xf32>
    %5 = vector.shape_cast %4 : vector<1x10x16x128xf32> to vector<10x16x128xf32>
    %6 = vector.shape_cast %5 : vector<10x16x128xf32> to vector<160x128xf32>
    %c0_i32_2 = arith.constant 0 : i32
    %7 = arith.addi %1, %c0_i32_2 : i32
    %c0_3 = arith.constant 0 : index
    %8 = arith.index_cast %7 : i32 to index
    %c1 = arith.constant 1 : index
    %c0_4 = arith.constant 0 : index
    %9 = vector.load %arg2[%c0_3, %8, %c1, %c0_4] : memref<1x20x18x128xf32, #tpu.memory_space<vmem>>, vector<1x10x16x128xf32>
    %10 = vector.shape_cast %9 : vector<1x10x16x128xf32> to vector<10x16x128xf32>
    %11 = vector.shape_cast %10 : vector<10x16x128xf32> to vector<160x128xf32>
    %c0_i32_5 = arith.constant 0 : i32
    %12 = arith.addi %1, %c0_i32_5 : i32
    %c0_6 = arith.constant 0 : index
    %13 = arith.index_cast %12 : i32 to index
    %c2 = arith.constant 2 : index
    %c0_7 = arith.constant 0 : index
    %14 = vector.load %arg2[%c0_6, %13, %c2, %c0_7] : memref<1x20x18x128xf32, #tpu.memory_space<vmem>>, vector<1x10x16x128xf32>
    %15 = vector.shape_cast %14 : vector<1x10x16x128xf32> to vector<10x16x128xf32>
    %16 = vector.shape_cast %15 : vector<10x16x128xf32> to vector<160x128xf32>
    %c1_i32 = arith.constant 1 : i32
    %17 = arith.addi %1, %c1_i32 : i32
    %c0_8 = arith.constant 0 : index
    %18 = arith.index_cast %17 : i32 to index
    %c0_9 = arith.constant 0 : index
    %c0_10 = arith.constant 0 : index
    %19 = vector.load %arg2[%c0_8, %18, %c0_9, %c0_10] : memref<1x20x18x128xf32, #tpu.memory_space<vmem>>, vector<1x10x16x128xf32>
    %20 = vector.shape_cast %19 : vector<1x10x16x128xf32> to vector<10x16x128xf32>
    %21 = vector.shape_cast %20 : vector<10x16x128xf32> to vector<160x128xf32>
    %c1_i32_11 = arith.constant 1 : i32
    %22 = arith.addi %1, %c1_i32_11 : i32
    %c0_12 = arith.constant 0 : index
    %23 = arith.index_cast %22 : i32 to index
    %c1_13 = arith.constant 1 : index
    %c0_14 = arith.constant 0 : index
    %24 = vector.load %arg2[%c0_12, %23, %c1_13, %c0_14] : memref<1x20x18x128xf32, #tpu.memory_space<vmem>>, vector<1x10x16x128xf32>
    %25 = vector.shape_cast %24 : vector<1x10x16x128xf32> to vector<10x16x128xf32>
    %26 = vector.shape_cast %25 : vector<10x16x128xf32> to vector<160x128xf32>
    %c1_i32_15 = arith.constant 1 : i32
    %27 = arith.addi %1, %c1_i32_15 : i32
    %c0_16 = arith.constant 0 : index
    %28 = arith.index_cast %27 : i32 to index
    %c2_17 = arith.constant 2 : index
    %c0_18 = arith.constant 0 : index
    %29 = vector.load %arg2[%c0_16, %28, %c2_17, %c0_18] : memref<1x20x18x128xf32, #tpu.memory_space<vmem>>, vector<1x10x16x128xf32>
    %30 = vector.shape_cast %29 : vector<1x10x16x128xf32> to vector<10x16x128xf32>
    %31 = vector.shape_cast %30 : vector<10x16x128xf32> to vector<160x128xf32>
    %c2_i32 = arith.constant 2 : i32
    %32 = arith.addi %1, %c2_i32 : i32
    %c0_19 = arith.constant 0 : index
    %33 = arith.index_cast %32 : i32 to index
    %c0_20 = arith.constant 0 : index
    %c0_21 = arith.constant 0 : index
    %34 = vector.load %arg2[%c0_19, %33, %c0_20, %c0_21] : memref<1x20x18x128xf32, #tpu.memory_space<vmem>>, vector<1x10x16x128xf32>
    %35 = vector.shape_cast %34 : vector<1x10x16x128xf32> to vector<10x16x128xf32>
    %36 = vector.shape_cast %35 : vector<10x16x128xf32> to vector<160x128xf32>
    %c2_i32_22 = arith.constant 2 : i32
    %37 = arith.addi %1, %c2_i32_22 : i32
    %c0_23 = arith.constant 0 : index
    %38 = arith.index_cast %37 : i32 to index
    %c1_24 = arith.constant 1 : index
    %c0_25 = arith.constant 0 : index
    %39 = vector.load %arg2[%c0_23, %38, %c1_24, %c0_25] : memref<1x20x18x128xf32, #tpu.memory_space<vmem>>, vector<1x10x16x128xf32>
    %40 = vector.shape_cast %39 : vector<1x10x16x128xf32> to vector<10x16x128xf32>
    %41 = vector.shape_cast %40 : vector<10x16x128xf32> to vector<160x128xf32>
    %c2_i32_26 = arith.constant 2 : i32
    %42 = arith.addi %1, %c2_i32_26 : i32
    %c0_27 = arith.constant 0 : index
    %43 = arith.index_cast %42 : i32 to index
    %c2_28 = arith.constant 2 : index
    %c0_29 = arith.constant 0 : index
    %44 = vector.load %arg2[%c0_27, %43, %c2_28, %c0_29] : memref<1x20x18x128xf32, #tpu.memory_space<vmem>>, vector<1x10x16x128xf32>
    %45 = vector.shape_cast %44 : vector<1x10x16x128xf32> to vector<10x16x128xf32>
    %46 = vector.shape_cast %45 : vector<10x16x128xf32> to vector<160x128xf32>
    %47 = tpu.concatenate %6, %11, %16, %21, %26, %31, %36, %41, %46 in 1 : vector<160x128xf32>, vector<160x128xf32>, vector<160x128xf32>, vector<160x128xf32>, vector<160x128xf32>, vector<160x128xf32>, vector<160x128xf32>, vector<160x128xf32>, vector<160x128xf32> -> vector<160x1152xf32>
    %c0_30 = arith.constant 0 : index
    %c0_31 = arith.constant 0 : index
    %48 = vector.load %arg3[%c0_30, %c0_31] : memref<1152x128xf32, #tpu.memory_space<vmem>>, vector<1152x128xf32>
    %cst = arith.constant dense<0.000000e+00> : vector<160x128xf32>
    %49 = tpu.matmul %47, %48, %cst {dimension_numbers = #tpu.dot_dimension_numbers<[1], [0], [0], [1], [0, 0, 1, 1], [], []>} : vector<160x1152xf32>, vector<1152x128xf32>, vector<160x128xf32> -> vector<160x128xf32>
    %c0_32 = arith.constant 0 : index
    %c0_33 = arith.constant 0 : index
    %50 = vector.load %arg5[%c0_32, %c0_33] : memref<2x128xf32, #tpu.memory_space<vmem>>, vector<1x128xf32>
    %51 = vector.broadcast %50 : vector<1x128xf32> to vector<160x128xf32>
    %52 = arith.addf %49, %51 : vector<160x128xf32>
    %cst_34 = arith.constant 0.000000e+00 : f32
    %53 = vector.broadcast %cst_34 : f32 to vector<160x128xf32>
    %54 = arith.maximumf %52, %53 : vector<160x128xf32>
    %55 = vector.shape_cast %54 : vector<160x128xf32> to vector<10x16x128xf32>
    %cst_35 = arith.constant 0.000000e+00 : f32
    %56 = vector.broadcast %cst_35 : f32 to vector<10x1x128xf32>
    %c0_36 = arith.constant 0 : index
    %c0_37 = arith.constant 0 : index
    %c0_38 = arith.constant 0 : index
    %57 = vector.load %arg7[%c0_36, %c0_37, %c0_38] : memref<10x18x128xf32, #tpu.memory_space<vmem>>, vector<10x1x128xf32>
    tpu.vector_store %arg7[%c0_36, %c0_37, %c0_38], %56 {strides = array<i32>} : memref<10x18x128xf32, #tpu.memory_space<vmem>>, vector<10x1x128xf32>,
    %c0_39 = arith.constant 0 : index
    %c17 = arith.constant 17 : index
    %c0_40 = arith.constant 0 : index
    %58 = vector.load %arg7[%c0_39, %c17, %c0_40] : memref<10x18x128xf32, #tpu.memory_space<vmem>>, vector<10x1x128xf32>
    tpu.vector_store %arg7[%c0_39, %c17, %c0_40], %56 {strides = array<i32>} : memref<10x18x128xf32, #tpu.memory_space<vmem>>, vector<10x1x128xf32>,
    %c0_41 = arith.constant 0 : index
    %c1_42 = arith.constant 1 : index
    %c0_43 = arith.constant 0 : index
    %59 = vector.load %arg7[%c0_41, %c1_42, %c0_43] : memref<10x18x128xf32, #tpu.memory_space<vmem>>, vector<10x16x128xf32>
    tpu.vector_store %arg7[%c0_41, %c1_42, %c0_43], %55 {strides = array<i32>} : memref<10x18x128xf32, #tpu.memory_space<vmem>>, vector<10x16x128xf32>,
    %cst_44 = arith.constant 0.000000e+00 : f32
    %60 = vector.broadcast %cst_44 : f32 to vector<1x18x128xf32>
    %c0_i32_45 = arith.constant 0 : i32
    %61 = arith.cmpi eq, %arg1, %c0_i32_45 : i32
    %62 = arith.extui %61 : i1 to i32
    %c0_i32_46 = arith.constant 0 : i32
    %63 = arith.cmpi ne, %62, %c0_i32_46 : i32
    scf.if %63 {
      %c0_90 = arith.constant 0 : index
      %c0_91 = arith.constant 0 : index
      %c0_92 = arith.constant 0 : index
      %103 = vector.load %arg7[%c0_90, %c0_91, %c0_92] : memref<10x18x128xf32, #tpu.memory_space<vmem>>, vector<1x18x128xf32>
      tpu.vector_store %arg7[%c0_90, %c0_91, %c0_92], %60 {strides = array<i32>} : memref<10x18x128xf32, #tpu.memory_space<vmem>>, vector<1x18x128xf32>,
    } else {
    }
    %c1_i32_47 = arith.constant 1 : i32
    %64 = arith.cmpi eq, %arg1, %c1_i32_47 : i32
    %65 = arith.extui %64 : i1 to i32
    %c0_i32_48 = arith.constant 0 : i32
    %66 = arith.cmpi ne, %65, %c0_i32_48 : i32
    scf.if %66 {
      %c9 = arith.constant 9 : index
      %c0_90 = arith.constant 0 : index
      %c0_91 = arith.constant 0 : index
      %103 = vector.load %arg7[%c9, %c0_90, %c0_91] : memref<10x18x128xf32, #tpu.memory_space<vmem>>, vector<1x18x128xf32>
      tpu.vector_store %arg7[%c9, %c0_90, %c0_91], %60 {strides = array<i32>} : memref<10x18x128xf32, #tpu.memory_space<vmem>>, vector<1x18x128xf32>,
    } else {
    }
    %c0_49 = arith.constant 0 : index
    %c0_50 = arith.constant 0 : index
    %c0_51 = arith.constant 0 : index
    %67 = vector.load %arg7[%c0_49, %c0_50, %c0_51] : memref<10x18x128xf32, #tpu.memory_space<vmem>>, vector<8x16x128xf32>
    %68 = vector.shape_cast %67 : vector<8x16x128xf32> to vector<128x128xf32>
    %c0_52 = arith.constant 0 : index
    %c1_53 = arith.constant 1 : index
    %c0_54 = arith.constant 0 : index
    %69 = vector.load %arg7[%c0_52, %c1_53, %c0_54] : memref<10x18x128xf32, #tpu.memory_space<vmem>>, vector<8x16x128xf32>
    %70 = vector.shape_cast %69 : vector<8x16x128xf32> to vector<128x128xf32>
    %c0_55 = arith.constant 0 : index
    %c2_56 = arith.constant 2 : index
    %c0_57 = arith.constant 0 : index
    %71 = vector.load %arg7[%c0_55, %c2_56, %c0_57] : memref<10x18x128xf32, #tpu.memory_space<vmem>>, vector<8x16x128xf32>
    %72 = vector.shape_cast %71 : vector<8x16x128xf32> to vector<128x128xf32>
    %c1_58 = arith.constant 1 : index
    %c0_59 = arith.constant 0 : index
    %c0_60 = arith.constant 0 : index
    %73 = vector.load %arg7[%c1_58, %c0_59, %c0_60] : memref<10x18x128xf32, #tpu.memory_space<vmem>>, vector<8x16x128xf32>
    %74 = vector.shape_cast %73 : vector<8x16x128xf32> to vector<128x128xf32>
    %c1_61 = arith.constant 1 : index
    %c1_62 = arith.constant 1 : index
    %c0_63 = arith.constant 0 : index
    %75 = vector.load %arg7[%c1_61, %c1_62, %c0_63] : memref<10x18x128xf32, #tpu.memory_space<vmem>>, vector<8x16x128xf32>
    %76 = vector.shape_cast %75 : vector<8x16x128xf32> to vector<128x128xf32>
    %c1_64 = arith.constant 1 : index
    %c2_65 = arith.constant 2 : index
    %c0_66 = arith.constant 0 : index
    %77 = vector.load %arg7[%c1_64, %c2_65, %c0_66] : memref<10x18x128xf32, #tpu.memory_space<vmem>>, vector<8x16x128xf32>
    %78 = vector.shape_cast %77 : vector<8x16x128xf32> to vector<128x128xf32>
    %c2_67 = arith.constant 2 : index
    %c0_68 = arith.constant 0 : index
    %c0_69 = arith.constant 0 : index
    %79 = vector.load %arg7[%c2_67, %c0_68, %c0_69] : memref<10x18x128xf32, #tpu.memory_space<vmem>>, vector<8x16x128xf32>
    %80 = vector.shape_cast %79 : vector<8x16x128xf32> to vector<128x128xf32>
    %c2_70 = arith.constant 2 : index
    %c1_71 = arith.constant 1 : index
    %c0_72 = arith.constant 0 : index
    %81 = vector.load %arg7[%c2_70, %c1_71, %c0_72] : memref<10x18x128xf32, #tpu.memory_space<vmem>>, vector<8x16x128xf32>
    %82 = vector.shape_cast %81 : vector<8x16x128xf32> to vector<128x128xf32>
    %c2_73 = arith.constant 2 : index
    %c2_74 = arith.constant 2 : index
    %c0_75 = arith.constant 0 : index
    %83 = vector.load %arg7[%c2_73, %c2_74, %c0_75] : memref<10x18x128xf32, #tpu.memory_space<vmem>>, vector<8x16x128xf32>
    %84 = vector.shape_cast %83 : vector<8x16x128xf32> to vector<128x128xf32>
    %85 = tpu.concatenate %68, %70, %72, %74, %76, %78, %80, %82, %84 in 1 : vector<128x128xf32>, vector<128x128xf32>, vector<128x128xf32>, vector<128x128xf32>, vector<128x128xf32>, vector<128x128xf32>, vector<128x128xf32>, vector<128x128xf32>, vector<128x128xf32> -> vector<128x1152xf32>
    %c0_76 = arith.constant 0 : index
    %c0_77 = arith.constant 0 : index
    %86 = vector.load %arg4[%c0_76, %c0_77] : memref<1152x128xf32, #tpu.memory_space<vmem>>, vector<1152x128xf32>
    %cst_78 = arith.constant dense<0.000000e+00> : vector<128x128xf32>
    %87 = tpu.matmul %85, %86, %cst_78 {dimension_numbers = #tpu.dot_dimension_numbers<[1], [0], [0], [1], [0, 0, 1, 1], [], []>} : vector<128x1152xf32>, vector<1152x128xf32>, vector<128x128xf32> -> vector<128x128xf32>
    %c1_79 = arith.constant 1 : index
    %c0_80 = arith.constant 0 : index
    %88 = vector.load %arg5[%c1_79, %c0_80] : memref<2x128xf32, #tpu.memory_space<vmem>>, vector<1x128xf32>
    %89 = vector.broadcast %88 : vector<1x128xf32> to vector<128x128xf32>
    %90 = arith.addf %87, %89 : vector<128x128xf32>
    %c2_i32_81 = arith.constant 2 : i32
    %91 = arith.addi %1, %c2_i32_81 : i32
    %c0_82 = arith.constant 0 : index
    %92 = arith.index_cast %91 : i32 to index
    %c1_83 = arith.constant 1 : index
    %c0_84 = arith.constant 0 : index
    %93 = vector.load %arg2[%c0_82, %92, %c1_83, %c0_84] : memref<1x20x18x128xf32, #tpu.memory_space<vmem>>, vector<1x8x16x128xf32>
    %94 = vector.shape_cast %93 : vector<1x8x16x128xf32> to vector<8x16x128xf32>
    %95 = vector.shape_cast %94 : vector<8x16x128xf32> to vector<128x128xf32>
    %96 = arith.addf %90, %95 : vector<128x128xf32>
    %cst_85 = arith.constant 0.000000e+00 : f32
    %97 = vector.broadcast %cst_85 : f32 to vector<128x128xf32>
    %98 = arith.maximumf %96, %97 : vector<128x128xf32>
    %99 = vector.shape_cast %98 : vector<128x128xf32> to vector<8x16x128xf32>
    %c0_86 = arith.constant 0 : index
    %c0_87 = arith.constant 0 : index
    %c0_88 = arith.constant 0 : index
    %c0_89 = arith.constant 0 : index
    %100 = vector.load %arg6[%c0_86, %c0_87, %c0_88, %c0_89] : memref<1x8x16x128xf32, #tpu.memory_space<vmem>>, vector<1x8x16x128xf32>
    %101 = vector.shape_cast %100 : vector<1x8x16x128xf32> to vector<8x16x128xf32>
    %102 = vector.shape_cast %99 : vector<8x16x128xf32> to vector<1x8x16x128xf32>
    tpu.vector_store %arg6[%c0_86, %c0_87, %c0_88, %c0_89], %102 {strides = array<i32>} : memref<1x8x16x128xf32, #tpu.memory_space<vmem>>, vector<1x8x16x128xf32>,
    return
  }
  func.func @transform_0(%arg0: i32, %arg1: i32) -> (i32, i32, i32, i32) {
    %c0_i32 = arith.constant 0 : i32
    %c0_i32_0 = arith.constant 0 : i32
    %c0_i32_1 = arith.constant 0 : i32
    %c0_i32_2 = arith.constant 0 : i32
    return %arg0, %c0_i32, %c0_i32_0, %c0_i32_1 : i32, i32, i32, i32
  }
  func.func @transform_1(%arg0: i32, %arg1: i32) -> (i32, i32) {
    %c0_i32 = arith.constant 0 : i32
    %c0_i32_0 = arith.constant 0 : i32
    %c0_i32_1 = arith.constant 0 : i32
    return %c0_i32, %c0_i32_0 : i32, i32
  }
  func.func @transform_2(%arg0: i32, %arg1: i32) -> (i32, i32) {
    %c0_i32 = arith.constant 0 : i32
    %c0_i32_0 = arith.constant 0 : i32
    %c0_i32_1 = arith.constant 0 : i32
    return %c0_i32, %c0_i32_0 : i32, i32
  }
  func.func @transform_3(%arg0: i32, %arg1: i32) -> (i32, i32) {
    %c0_i32 = arith.constant 0 : i32
    %c0_i32_0 = arith.constant 0 : i32
    %c0_i32_1 = arith.constant 0 : i32
    return %c0_i32, %c0_i32_0 : i32, i32
  }
  func.func @transform_4(%arg0: i32, %arg1: i32) -> (i32, i32, i32, i32) {
    %c0_i32 = arith.constant 0 : i32
    %c0_i32_0 = arith.constant 0 : i32
    %c0_i32_1 = arith.constant 0 : i32
    return %arg0, %arg1, %c0_i32, %c0_i32_0 : i32, i32, i32, i32
  }
}

</mosaic_0001>

<llo_original>
// kernel: tpu_custom_call.1
$region0: #{tpu_custom_call.1}
  #allocation0 [shape = 'u32[]', space=smem, size = 0x4, offset = 0x4, fixed_abs, tag = 'smem constant byte address 0x4 - core index']
  #allocation1 [shape = 'u32[72,128]{1,0:T(1,128)}', space=vmem, size = 0x9000, scoped, tag = 'internal scratch']
  #allocation2 [shape = 'f32[10,18,128]{2,1,0:T(8,128)}', space=vmem, size = 0x1e000, scoped, tag = 'scratch operand']
  %s0 = inlined_call_operand.vmem [shape: f32[2,20,18,128], index: 0, kind: input, shape index: {}]
  %s1 = inlined_call_operand.vmem [shape: f32[1152,128], index: 1, kind: input, shape index: {}]
  %s2 = inlined_call_operand.hbm [shape: f32[1152,128], index: 2, kind: input, shape index: {}]
  %s3 = inlined_call_operand.vmem [shape: f32[2,128], index: 3, kind: input, shape index: {}]
  %s4 = inlined_call_operand.hbm [shape: f32[2,16,16,128], index: 4, kind: output, shape index: {}]
  %s5 = sld [smem:[#allocation0]]
  $region61: #{tpu_custom_call.1} parent=0
    _
  %s7 = ssub.s32 1, %s5
  %s8 = scalar_select 0, %s7, %s5
  $region1: #{tpu_custom_call.1} parent=0
    #allocation3 [shape = 'u8[589824]{0}', space=vmem, size = 0x90000, scoped, tag = 'input window, operand 2, single buffered']
    #allocation4 [shape = 's32[2]{0}', space=sflag, size = 0x8, scoped, tag = 'scoped memory for tpu_custom_call.1']
    #allocation5 [shape = 's32[2]{0}', space=sflag, size = 0x8, scoped, tag = 'scoped memory for tpu_custom_call.1']
    #allocation6 [shape = 'u8[131072]{0}', space=vmem, size = 0x20000, scoped, tag = 'output window, operand 0']
    %9 = vsyncpa [#allocation4], 0
    %10 = vsyncpa [#allocation5], 0
    %s11 = scalar_lea.sflag [#allocation5], 1
    %12 = vsyncpa %s11, 0
    loop: start=0, step=1, limit=6
    $region2: #{tpu_custom_call.1} parent=1 // loop_pre_header
      _
    $region3: #{tpu_custom_call.1} parent=1 // loop_header
      %s14 = sphi 0, %s18
      %p15 = scmp.ge.s32.totalorder %s14, 6
      %s21 = sphi 0, %s33
      %s22 = sphi 0, %s29
      %s23 = sphi 0, %s21
      %s24 = sphi 0, %s22
      %s25 = sphi 0, %s23
      %s26 = sphi 0, %s24
      %s36 = sphi 0, %s38
      %s39 = sphi 0, %s36
      %s40 = sphi 0, %s39
      %s56 = sphi 0, %s40
      %s60 = sphi 0, %s60
      %s62 = sphi 0, %s60
      %s63 = sphi 0, %s62
      %s77 = sphi 0, %s63
      %s81 = sphi 0, %s81
      %s83 = sphi 0, %s81
      %s84 = sphi 0, %s83
      %s98 = sphi 0, %s84
      %s102 = sphi 0, %s102
      %s104 = sphi 0, %s102
      %s105 = sphi 0, %s104
      %s119 = sphi 0, %s105
      %s127 = sphi 0, %s129
      %s130 = sphi 0, %s127
      %s131 = sphi 0, %s130
      %s147 = sphi 0, %s131
    $region4: #{tpu_custom_call.1} parent=1 // loop_header_branch
      %17 = sbr.rel (%p15) target = $region8
    $region5: #{tpu_custom_call.1} parent=1 // loop_body
      %s19 = ssub.s32 %s14, 1
      %s20 = ssub.s32 %s14, 2
      %s27 = sadd.s32 1, %s22
      %p28 = scmp.ge.s32.totalorder %s27, 2
      %s29 = scalar_select %p28, 0, %s27
      %s30 = sadd.s32 1, %s21
      %s31 = scalar_select %p28, %s30, %s21
      %p32 = scmp.ge.s32.totalorder %s31, 2
      %s33 = scalar_select %p32, 0, %s31
      %s34 = ssub.s32 %s21, %s33
      %p35 = scmp.eq.s32.totalorder %s34, 0
      %s37 = sadd.s32 %s36, 1
      %s38 = scalar_select %p35, %s36, %s37
      %p41 = pneg %p35
      %p42 = scmp.eq.s32.totalorder %s14, 3
      %p43 = por %p41, %p42
      %p44 = scmp.ne.s32.totalorder %s36, %s39
      %p45 = scmp.eq.s32.totalorder %s14, 0
      %p46 = por %p44, %p45
      %p47 = scmp.ne.s32.totalorder %s36, %s39
      %p48 = scmp.eq.s32.totalorder %s19, 3
      %p49 = por %p47, %p48
      %p50 = scmp.ne.s32.totalorder %s39, %s40
      %p51 = scmp.eq.s32.totalorder %s19, 0
      %p52 = por %p50, %p51
      %p53 = scmp.ne.s32.totalorder %s39, %s40
      %p54 = scmp.eq.s32.totalorder %s20, 3
      %p55 = por %p53, %p54
      %p57 = scmp.ne.s32.totalorder %s40, %s56
      %p58 = scmp.eq.s32.totalorder %s20, 0
      %p59 = por %p57, %p58
      %s61 = sadd.s32 %s60, 1
      %p64 = scmp.eq.s32.totalorder %s14, 3
      %p65 = scmp.ne.s32.totalorder %s60, %s62
      %p66 = scmp.eq.s32.totalorder %s14, 0
      %p67 = por %p65, %p66
      %p68 = scmp.ne.s32.totalorder %s60, %s62
      %p69 = scmp.eq.s32.totalorder %s19, 3
      %p70 = por %p68, %p69
      %p71 = scmp.ne.s32.totalorder %s62, %s63
      %p72 = scmp.eq.s32.totalorder %s19, 0
      %p73 = por %p71, %p72
      %p74 = scmp.ne.s32.totalorder %s62, %s63
      %p75 = scmp.eq.s32.totalorder %s20, 3
      %p76 = por %p74, %p75
      %p78 = scmp.ne.s32.totalorder %s63, %s77
      %p79 = scmp.eq.s32.totalorder %s20, 0
      %p80 = por %p78, %p79
      %s82 = sadd.s32 %s81, 1
      %p85 = scmp.eq.s32.totalorder %s14, 3
      %p86 = scmp.ne.s32.totalorder %s81, %s83
      %p87 = scmp.eq.s32.totalorder %s14, 0
      %p88 = por %p86, %p87
      %p89 = scmp.ne.s32.totalorder %s81, %s83
      %p90 = scmp.eq.s32.totalorder %s19, 3
      %p91 = por %p89, %p90
      %p92 = scmp.ne.s32.totalorder %s83, %s84
      %p93 = scmp.eq.s32.totalorder %s19, 0
      %p94 = por %p92, %p93
      %p95 = scmp.ne.s32.totalorder %s83, %s84
      %p96 = scmp.eq.s32.totalorder %s20, 3
      %p97 = por %p95, %p96
      %p99 = scmp.ne.s32.totalorder %s84, %s98
      %p100 = scmp.eq.s32.totalorder %s20, 0
      %p101 = por %p99, %p100
      %s103 = sadd.s32 %s102, 1
      %p106 = scmp.eq.s32.totalorder %s14, 3
      %p107 = scmp.ne.s32.totalorder %s102, %s104
      %p108 = scmp.eq.s32.totalorder %s14, 0
      %p109 = por %p107, %p108
      %p110 = scmp.ne.s32.totalorder %s102, %s104
      %p111 = scmp.eq.s32.totalorder %s19, 3
      %p112 = por %p110, %p111
      %p113 = scmp.ne.s32.totalorder %s104, %s105
      %p114 = scmp.eq.s32.totalorder %s19, 0
      %p115 = por %p113, %p114
      %p116 = scmp.ne.s32.totalorder %s104, %s105
      %p117 = scmp.eq.s32.totalorder %s20, 3
      %p118 = por %p116, %p117
      %p120 = scmp.ne.s32.totalorder %s105, %s119
      %p121 = scmp.eq.s32.totalorder %s20, 0
      %p122 = por %p120, %p121
      %s123 = ssub.s32 %s21, %s33
      %s124 = ssub.s32 %s22, %s29
      %s125 = sor.u32 %s123, %s124
      %p126 = scmp.eq.s32.totalorder %s125, 0
      %s128 = sadd.s32 %s127, 1
      %s129 = scalar_select %p126, %s127, %s128
      %p132 = pneg %p126
      %p133 = scmp.eq.s32.totalorder %s14, 3
      %p134 = por %p132, %p133
      %p135 = scmp.ne.s32.totalorder %s127, %s130
      %p136 = scmp.eq.s32.totalorder %s14, 0
      %p137 = por %p135, %p136
      %p138 = scmp.ne.s32.totalorder %s127, %s130
      %p139 = scmp.eq.s32.totalorder %s19, 3
      %p140 = por %p138, %p139
      %p141 = scmp.ne.s32.totalorder %s130, %s131
      %p142 = scmp.eq.s32.totalorder %s19, 0
      %p143 = por %p141, %p142
      %p144 = scmp.ne.s32.totalorder %s130, %s131
      %p145 = scmp.eq.s32.totalorder %s20, 3
      %p146 = por %p144, %p145
      %p148 = scmp.ne.s32.totalorder %s131, %s147
      %p149 = scmp.eq.s32.totalorder %s20, 0
      %p150 = por %p148, %p149
      %p151 = scmp.le.s32.totalorder 1, %s14
      %p152 = scmp.lt.s32.totalorder %s14, 5
      %p153 = pnand %p151, %p152
      %p154 = pneg %p153
      // Predicated region
      $region9: #{tpu_custom_call.1} parent=5 // pred_check
        _
      $region10: #{tpu_custom_call.1} parent=5 // pred_check_branch
        %156 = sbr.rel (%p153) target = $region12
      $region11: #{tpu_custom_call.1} parent=5 // pred_region
        %s157 = ssub.s32 %s14, 1
        // Predicated region
        $region13: #{tpu_custom_call.1} parent=11 // pred_check
          %p158 = pneg %p73
        $region14: #{tpu_custom_call.1} parent=11 // pred_check_branch
          %160 = sbr.rel (%p158) target = $region16
        $region15: #{tpu_custom_call.1} parent=11 // pred_region
          _
        $region16: #{tpu_custom_call.1} parent=11 // pred_fallthru
          _
        // Predicated region
        $region17: #{tpu_custom_call.1} parent=11 // pred_check
          %p161 = pneg %p94
        $region18: #{tpu_custom_call.1} parent=11 // pred_check_branch
          %163 = sbr.rel (%p161) target = $region20
        $region19: #{tpu_custom_call.1} parent=11 // pred_region
          %165 = vsyncadd [#allocation4], 0
          %s166 = sshll.u32 %s2, 4
          %s167 = int_to_ptr.hbm [resolvable:$true] %s166
          %s168 = sshll.u32 [#allocation3], 4
          %s169 = int_to_ptr.vmem [resolvable:$true] %s168
          %174 = dma.hbm_to_vmem [thread:$0]  %s167, 18432, %s169, [#allocation4], 128, 128, 8
        $region20: #{tpu_custom_call.1} parent=11 // pred_fallthru
          _
        // Predicated region
        $region21: #{tpu_custom_call.1} parent=11 // pred_check
          %p175 = pneg %p115
        $region22: #{tpu_custom_call.1} parent=11 // pred_check_branch
          %177 = sbr.rel (%p175) target = $region24
        $region23: #{tpu_custom_call.1} parent=11 // pred_region
          _
        $region24: #{tpu_custom_call.1} parent=11 // pred_fallthru
          _
      $region12: #{tpu_custom_call.1} parent=5 // pred_fallthru
        _
      %p178 = scmp.lt.s32.totalorder %s14, 4
      // Predicated region
      $region25: #{tpu_custom_call.1} parent=5 // pred_check
        %p179 = pneg %p178
      $region26: #{tpu_custom_call.1} parent=5 // pred_check_branch
        %181 = sbr.rel (%p179) target = $region28
      $region27: #{tpu_custom_call.1} parent=5 // pred_region
        // Predicated region
        $region29: #{tpu_custom_call.1} parent=27 // pred_check
          %p182 = pneg %p46
        $region30: #{tpu_custom_call.1} parent=27 // pred_check_branch
          %184 = sbr.rel (%p182) target = $region32
        $region31: #{tpu_custom_call.1} parent=27 // pred_region
          %p185 = scmp.lt.s32.totalorder %s21, 1
          %s186 = scalar_select %p185, %s21, 1
          %s187 = smul.addr %s186, 60
          %s188 = smul.addr %s187, 8
          %s189 = scalar_lea.vmem %s0, %s188
        $region32: #{tpu_custom_call.1} parent=27 // pred_fallthru
          _
      $region28: #{tpu_custom_call.1} parent=5 // pred_fallthru
        _
      %p190 = scmp.le.s32.totalorder 1, %s14
      %p191 = scmp.lt.s32.totalorder %s14, 5
      %p192 = pnand %p190, %p191
      %p193 = pneg %p192
      // Predicated region
      $region33: #{tpu_custom_call.1} parent=5 // pred_check
        _
      $region34: #{tpu_custom_call.1} parent=5 // pred_check_branch
        %195 = sbr.rel (%p192) target = $region36
      $region35: #{tpu_custom_call.1} parent=5 // pred_region
        %s196 = ssub.s32 %s14, 1
        // Predicated region
        $region37: #{tpu_custom_call.1} parent=35 // pred_check
          %p197 = pneg %p94
        $region38: #{tpu_custom_call.1} parent=35 // pred_check_branch
          %199 = sbr.rel (%p197) target = $region40
        $region39: #{tpu_custom_call.1} parent=35 // pred_region
          %201 = dma.done [#allocation4], 18432
        $region40: #{tpu_custom_call.1} parent=35 // pred_fallthru
          _
        %p202 = scmp.lt.s32.totalorder %s23, 1
        %s203 = scalar_select %p202, %s23, 1
        %s204 = smul.addr %s203, 60
        %s205 = smul.addr %s204, 8
        %s206 = scalar_lea.vmem %s0, %s205
        %p207 = pneg %p52
        %p208 = pneg %p49
        %p209 = pneg %p73
        %p210 = pneg %p70
        %p211 = pneg %p94
        %p212 = pneg %p91
        %p213 = pneg %p115
        %p214 = pneg %p112
        %p215 = pneg %p143
        %p216 = pneg %p140
        %s217 = sand.u32 %s130, 1
        %s218 = scalar_lea.sflag [#allocation5], %s217
        %s219 = sand.u32 %s130, 1
        %s220 = smul.addr %s219, 128
        %s221 = scalar_lea.vmem [#allocation6], %s220
        %p222 = scmp.lt.s32.totalorder %s23, 1
        %s223 = scalar_select %p222, %s23, 1
        %s224 = smul.addr %s223, 60
        %s225 = smul.addr %s224, 8
        %s226 = scalar_lea.vmem %s0, %s225
        %s227 = smul.u32 8, %s24
        %s228 = smul.u32 %s24, 8
        %s229 = smul.u32 %s228, 24
        %s230 = scalar_lea.vmem %s226, %s229
        %v231 = vld [vmem:[%s230] sm:$0xff]
        %v232 = vld [vmem:[%s230 + $0x8] sm:$0xff]
        %v233 = vld [vmem:[%s230 + $0x18] sm:$0xff]
        %v234 = vld [vmem:[%s230 + $0x20] sm:$0xff]
        %v235 = vld [vmem:[%s230 + $0x30] sm:$0xff]
        %v236 = vld [vmem:[%s230 + $0x38] sm:$0xff]
        %v237 = vld [vmem:[%s230 + $0x48] sm:$0xff]
        %v238 = vld [vmem:[%s230 + $0x50] sm:$0xff]
        %v239 = vld [vmem:[%s230 + $0x60] sm:$0xff]
        %v240 = vld [vmem:[%s230 + $0x68] sm:$0xff]
        %v241 = vld [vmem:[%s230 + $0x78] sm:$0xff]
        %v242 = vld [vmem:[%s230 + $0x80] sm:$0xff]
        %v243 = vld [vmem:[%s230 + $0x90] sm:$0xff]
        %v244 = vld [vmem:[%s230 + $0x98] sm:$0xff]
        %v245 = vld [vmem:[%s230 + $0xa8] sm:$0xff]
        %v246 = vld [vmem:[%s230 + $0xb0] sm:$0xff]
        %v247 = vld [vmem:[%s230 + $0xc0] sm:$0xff]
        %v248 = vld [vmem:[%s230 + $0xc8] sm:$0xff]
        %v249 = vld [vmem:[%s230 + $0xd8] sm:$0xff]
        %v250 = vld [vmem:[%s230 + $0xe0] sm:$0xff]
        %v251 = vld [vmem:[%s230 + $0x1] sm:$0xff]
        %v252 = vld [vmem:[%s230 + $0x9] sm:$0xff]
        %v253 = vld [vmem:[%s230 + $0x19] sm:$0xff]
        %v254 = vld [vmem:[%s230 + $0x21] sm:$0xff]
        %v255 = vld [vmem:[%s230 + $0x31] sm:$0xff]
        %v256 = vld [vmem:[%s230 + $0x39] sm:$0xff]
        %v257 = vld [vmem:[%s230 + $0x49] sm:$0xff]
        %v258 = vld [vmem:[%s230 + $0x51] sm:$0xff]
        %v259 = vld [vmem:[%s230 + $0x61] sm:$0xff]
        %v260 = vld [vmem:[%s230 + $0x69] sm:$0xff]
        %v261 = vld [vmem:[%s230 + $0x79] sm:$0xff]
        %v262 = vld [vmem:[%s230 + $0x81] sm:$0xff]
        %v263 = vld [vmem:[%s230 + $0x91] sm:$0xff]
        %v264 = vld [vmem:[%s230 + $0x99] sm:$0xff]
        %v265 = vld [vmem:[%s230 + $0xa9] sm:$0xff]
        %v266 = vld [vmem:[%s230 + $0xb1] sm:$0xff]
        %v267 = vld [vmem:[%s230 + $0xc1] sm:$0xff]
        %v268 = vld [vmem:[%s230 + $0xc9] sm:$0xff]
        %v269 = vld [vmem:[%s230 + $0xd9] sm:$0xff]
        %v270 = vld [vmem:[%s230 + $0xe1] sm:$0xff]
        %v271 = vld [vmem:[%s230 + $0x2] sm:$0xff]
        %v272 = vld [vmem:[%s230 + $0xa] sm:$0xff]
        %v273 = vld [vmem:[%s230 + $0x1a] sm:$0xff]
        %v274 = vld [vmem:[%s230 + $0x22] sm:$0xff]
        %v275 = vld [vmem:[%s230 + $0x32] sm:$0xff]
        %v276 = vld [vmem:[%s230 + $0x3a] sm:$0xff]
        %v277 = vld [vmem:[%s230 + $0x4a] sm:$0xff]
        %v278 = vld [vmem:[%s230 + $0x52] sm:$0xff]
        %v279 = vld [vmem:[%s230 + $0x62] sm:$0xff]
        %v280 = vld [vmem:[%s230 + $0x6a] sm:$0xff]
        %v281 = vld [vmem:[%s230 + $0x7a] sm:$0xff]
        %v282 = vld [vmem:[%s230 + $0x82] sm:$0xff]
        %v283 = vld [vmem:[%s230 + $0x92] sm:$0xff]
        %v284 = vld [vmem:[%s230 + $0x9a] sm:$0xff]
        %v285 = vld [vmem:[%s230 + $0xaa] sm:$0xff]
        %v286 = vld [vmem:[%s230 + $0xb2] sm:$0xff]
        %v287 = vld [vmem:[%s230 + $0xc2] sm:$0xff]
        %v288 = vld [vmem:[%s230 + $0xca] sm:$0xff]
        %v289 = vld [vmem:[%s230 + $0xda] sm:$0xff]
        %v290 = vld [vmem:[%s230 + $0xe2] sm:$0xff]
        %s291 = sadd.s32 %s228, 1
        %s292 = smul.u32 %s291, 24
        %s293 = scalar_lea.vmem %s226, %s292
        %v294 = vld [vmem:[%s293] sm:$0xff]
        %v295 = vld [vmem:[%s293 + $0x8] sm:$0xff]
        %v296 = vld [vmem:[%s293 + $0x18] sm:$0xff]
        %v297 = vld [vmem:[%s293 + $0x20] sm:$0xff]
        %v298 = vld [vmem:[%s293 + $0x30] sm:$0xff]
        %v299 = vld [vmem:[%s293 + $0x38] sm:$0xff]
        %v300 = vld [vmem:[%s293 + $0x48] sm:$0xff]
        %v301 = vld [vmem:[%s293 + $0x50] sm:$0xff]
        %v302 = vld [vmem:[%s293 + $0x60] sm:$0xff]
        %v303 = vld [vmem:[%s293 + $0x68] sm:$0xff]
        %v304 = vld [vmem:[%s293 + $0x78] sm:$0xff]
        %v305 = vld [vmem:[%s293 + $0x80] sm:$0xff]
        %v306 = vld [vmem:[%s293 + $0x90] sm:$0xff]
        %v307 = vld [vmem:[%s293 + $0x98] sm:$0xff]
        %v308 = vld [vmem:[%s293 + $0xa8] sm:$0xff]
        %v309 = vld [vmem:[%s293 + $0xb0] sm:$0xff]
        %v310 = vld [vmem:[%s293 + $0xc0] sm:$0xff]
        %v311 = vld [vmem:[%s293 + $0xc8] sm:$0xff]
        %v312 = vld [vmem:[%s293 + $0xd8] sm:$0xff]
        %v313 = vld [vmem:[%s293 + $0xe0] sm:$0xff]
        %v314 = vld [vmem:[%s293 + $0x1] sm:$0xff]
        %v315 = vld [vmem:[%s293 + $0x9] sm:$0xff]
        %v316 = vld [vmem:[%s293 + $0x19] sm:$0xff]
        %v317 = vld [vmem:[%s293 + $0x21] sm:$0xff]
        %v318 = vld [vmem:[%s293 + $0x31] sm:$0xff]
        %v319 = vld [vmem:[%s293 + $0x39] sm:$0xff]
        %v320 = vld [vmem:[%s293 + $0x49] sm:$0xff]
        %v321 = vld [vmem:[%s293 + $0x51] sm:$0xff]
        %v322 = vld [vmem:[%s293 + $0x61] sm:$0xff]
        %v323 = vld [vmem:[%s293 + $0x69] sm:$0xff]
        %v324 = vld [vmem:[%s293 + $0x79] sm:$0xff]
        %v325 = vld [vmem:[%s293 + $0x81] sm:$0xff]
        %v326 = vld [vmem:[%s293 + $0x91] sm:$0xff]
        %v327 = vld [vmem:[%s293 + $0x99] sm:$0xff]
        %v328 = vld [vmem:[%s293 + $0xa9] sm:$0xff]
        %v329 = vld [vmem:[%s293 + $0xb1] sm:$0xff]
        %v330 = vld [vmem:[%s293 + $0xc1] sm:$0xff]
        %v331 = vld [vmem:[%s293 + $0xc9] sm:$0xff]
        %v332 = vld [vmem:[%s293 + $0xd9] sm:$0xff]
        %v333 = vld [vmem:[%s293 + $0xe1] sm:$0xff]
        %v334 = vld [vmem:[%s293 + $0x2] sm:$0xff]
        %v335 = vld [vmem:[%s293 + $0xa] sm:$0xff]
        %v336 = vld [vmem:[%s293 + $0x1a] sm:$0xff]
        %v337 = vld [vmem:[%s293 + $0x22] sm:$0xff]
        %v338 = vld [vmem:[%s293 + $0x32] sm:$0xff]
        %v339 = vld [vmem:[%s293 + $0x3a] sm:$0xff]
        %v340 = vld [vmem:[%s293 + $0x4a] sm:$0xff]
        %v341 = vld [vmem:[%s293 + $0x52] sm:$0xff]
        %v342 = vld [vmem:[%s293 + $0x62] sm:$0xff]
        %v343 = vld [vmem:[%s293 + $0x6a] sm:$0xff]
        %v344 = vld [vmem:[%s293 + $0x7a] sm:$0xff]
        %v345 = vld [vmem:[%s293 + $0x82] sm:$0xff]
        %v346 = vld [vmem:[%s293 + $0x92] sm:$0xff]
        %v347 = vld [vmem:[%s293 + $0x9a] sm:$0xff]
        %v348 = vld [vmem:[%s293 + $0xaa] sm:$0xff]
        %v349 = vld [vmem:[%s293 + $0xb2] sm:$0xff]
        %v350 = vld [vmem:[%s293 + $0xc2] sm:$0xff]
        %v351 = vld [vmem:[%s293 + $0xca] sm:$0xff]
        %v352 = vld [vmem:[%s293 + $0xda] sm:$0xff]
        %v353 = vld [vmem:[%s293 + $0xe2] sm:$0xff]
        %s354 = sadd.s32 %s228, 2
        %s355 = smul.u32 %s354, 24
        %s356 = scalar_lea.vmem %s226, %s355
        %v357 = vld [vmem:[%s356] sm:$0xff]
        %v358 = vld [vmem:[%s356 + $0x8] sm:$0xff]
        %v359 = vld [vmem:[%s356 + $0x18] sm:$0xff]
        %v360 = vld [vmem:[%s356 + $0x20] sm:$0xff]
        %v361 = vld [vmem:[%s356 + $0x30] sm:$0xff]
        %v362 = vld [vmem:[%s356 + $0x38] sm:$0xff]
        %v363 = vld [vmem:[%s356 + $0x48] sm:$0xff]
        %v364 = vld [vmem:[%s356 + $0x50] sm:$0xff]
        %v365 = vld [vmem:[%s356 + $0x60] sm:$0xff]
        %v366 = vld [vmem:[%s356 + $0x68] sm:$0xff]
        %v367 = vld [vmem:[%s356 + $0x78] sm:$0xff]
        %v368 = vld [vmem:[%s356 + $0x80] sm:$0xff]
        %v369 = vld [vmem:[%s356 + $0x90] sm:$0xff]
        %v370 = vld [vmem:[%s356 + $0x98] sm:$0xff]
        %v371 = vld [vmem:[%s356 + $0xa8] sm:$0xff]
        %v372 = vld [vmem:[%s356 + $0xb0] sm:$0xff]
        %v373 = vld [vmem:[%s356 + $0xc0] sm:$0xff]
        %v374 = vld [vmem:[%s356 + $0xc8] sm:$0xff]
        %v375 = vld [vmem:[%s356 + $0xd8] sm:$0xff]
        %v376 = vld [vmem:[%s356 + $0xe0] sm:$0xff]
        %v377 = vld [vmem:[%s356 + $0x1] sm:$0xff]
        %v378 = vld [vmem:[%s356 + $0x9] sm:$0xff]
        %v379 = vld [vmem:[%s356 + $0x19] sm:$0xff]
        %v380 = vld [vmem:[%s356 + $0x21] sm:$0xff]
        %v381 = vld [vmem:[%s356 + $0x31] sm:$0xff]
        %v382 = vld [vmem:[%s356 + $0x39] sm:$0xff]
        %v383 = vld [vmem:[%s356 + $0x49] sm:$0xff]
        %v384 = vld [vmem:[%s356 + $0x51] sm:$0xff]
        %v385 = vld [vmem:[%s356 + $0x61] sm:$0xff]
        %v386 = vld [vmem:[%s356 + $0x69] sm:$0xff]
        %v387 = vld [vmem:[%s356 + $0x79] sm:$0xff]
        %v388 = vld [vmem:[%s356 + $0x81] sm:$0xff]
        %v389 = vld [vmem:[%s356 + $0x91] sm:$0xff]
        %v390 = vld [vmem:[%s356 + $0x99] sm:$0xff]
        %v391 = vld [vmem:[%s356 + $0xa9] sm:$0xff]
        %v392 = vld [vmem:[%s356 + $0xb1] sm:$0xff]
        %v393 = vld [vmem:[%s356 + $0xc1] sm:$0xff]
        %v394 = vld [vmem:[%s356 + $0xc9] sm:$0xff]
        %v395 = vld [vmem:[%s356 + $0xd9] sm:$0xff]
        %v396 = vld [vmem:[%s356 + $0xe1] sm:$0xff]
        %v397 = vld [vmem:[%s356 + $0x2] sm:$0xff]
        %v398 = vld [vmem:[%s356 + $0xa] sm:$0xff]
        %v399 = vld [vmem:[%s356 + $0x1a] sm:$0xff]
        %v400 = vld [vmem:[%s356 + $0x22] sm:$0xff]
        %v401 = vld [vmem:[%s356 + $0x32] sm:$0xff]
        %v402 = vld [vmem:[%s356 + $0x3a] sm:$0xff]
        %v403 = vld [vmem:[%s356 + $0x4a] sm:$0xff]
        %v404 = vld [vmem:[%s356 + $0x52] sm:$0xff]
        %v405 = vld [vmem:[%s356 + $0x62] sm:$0xff]
        %v406 = vld [vmem:[%s356 + $0x6a] sm:$0xff]
        %v407 = vld [vmem:[%s356 + $0x7a] sm:$0xff]
        %v408 = vld [vmem:[%s356 + $0x82] sm:$0xff]
        %v409 = vld [vmem:[%s356 + $0x92] sm:$0xff]
        %v410 = vld [vmem:[%s356 + $0x9a] sm:$0xff]
        %v411 = vld [vmem:[%s356 + $0xaa] sm:$0xff]
        %v412 = vld [vmem:[%s356 + $0xb2] sm:$0xff]
        %v413 = vld [vmem:[%s356 + $0xc2] sm:$0xff]
        %v414 = vld [vmem:[%s356 + $0xca] sm:$0xff]
        %v415 = vld [vmem:[%s356 + $0xda] sm:$0xff]
        %v416 = vld [vmem:[%s356 + $0xe2] sm:$0xff]
        %v417 = vld [vmem:[%s1] sm:$0xff]
        %v418 = vld [vmem:[%s1 + $0x8] sm:$0xff]
        %v419 = vld [vmem:[%s1 + $0x10] sm:$0xff]
        %v420 = vld [vmem:[%s1 + $0x18] sm:$0xff]
        %v421 = vld [vmem:[%s1 + $0x20] sm:$0xff]
        %v422 = vld [vmem:[%s1 + $0x28] sm:$0xff]
        %v423 = vld [vmem:[%s1 + $0x30] sm:$0xff]
        %v424 = vld [vmem:[%s1 + $0x38] sm:$0xff]
        %v425 = vld [vmem:[%s1 + $0x40] sm:$0xff]
        %v426 = vld [vmem:[%s1 + $0x48] sm:$0xff]
        %v427 = vld [vmem:[%s1 + $0x50] sm:$0xff]
        %v428 = vld [vmem:[%s1 + $0x58] sm:$0xff]
        %v429 = vld [vmem:[%s1 + $0x60] sm:$0xff]
        %v430 = vld [vmem:[%s1 + $0x68] sm:$0xff]
        %v431 = vld [vmem:[%s1 + $0x70] sm:$0xff]
        %v432 = vld [vmem:[%s1 + $0x78] sm:$0xff]
        %v433 = vld [vmem:[%s1 + $0x80] sm:$0xff]
        %v434 = vld [vmem:[%s1 + $0x88] sm:$0xff]
        %v435 = vld [vmem:[%s1 + $0x90] sm:$0xff]
        %v436 = vld [vmem:[%s1 + $0x98] sm:$0xff]
        %v437 = vld [vmem:[%s1 + $0xa0] sm:$0xff]
        %v438 = vld [vmem:[%s1 + $0xa8] sm:$0xff]
        %v439 = vld [vmem:[%s1 + $0xb0] sm:$0xff]
        %v440 = vld [vmem:[%s1 + $0xb8] sm:$0xff]
        %v441 = vld [vmem:[%s1 + $0xc0] sm:$0xff]
        %v442 = vld [vmem:[%s1 + $0xc8] sm:$0xff]
        %v443 = vld [vmem:[%s1 + $0xd0] sm:$0xff]
        %v444 = vld [vmem:[%s1 + $0xd8] sm:$0xff]
        %v445 = vld [vmem:[%s1 + $0xe0] sm:$0xff]
        %v446 = vld [vmem:[%s1 + $0xe8] sm:$0xff]
        %v447 = vld [vmem:[%s1 + $0xf0] sm:$0xff]
        %v448 = vld [vmem:[%s1 + $0xf8] sm:$0xff]
        %v449 = vld [vmem:[%s1 + $0x100] sm:$0xff]
        %v450 = vld [vmem:[%s1 + $0x108] sm:$0xff]
        %v451 = vld [vmem:[%s1 + $0x110] sm:$0xff]
        %v452 = vld [vmem:[%s1 + $0x118] sm:$0xff]
        %v453 = vld [vmem:[%s1 + $0x120] sm:$0xff]
        %v454 = vld [vmem:[%s1 + $0x128] sm:$0xff]
        %v455 = vld [vmem:[%s1 + $0x130] sm:$0xff]
        %v456 = vld [vmem:[%s1 + $0x138] sm:$0xff]
        %v457 = vld [vmem:[%s1 + $0x140] sm:$0xff]
        %v458 = vld [vmem:[%s1 + $0x148] sm:$0xff]
        %v459 = vld [vmem:[%s1 + $0x150] sm:$0xff]
        %v460 = vld [vmem:[%s1 + $0x158] sm:$0xff]
        %v461 = vld [vmem:[%s1 + $0x160] sm:$0xff]
        %v462 = vld [vmem:[%s1 + $0x168] sm:$0xff]
        %v463 = vld [vmem:[%s1 + $0x170] sm:$0xff]
        %v464 = vld [vmem:[%s1 + $0x178] sm:$0xff]
        %v465 = vld [vmem:[%s1 + $0x180] sm:$0xff]
        %v466 = vld [vmem:[%s1 + $0x188] sm:$0xff]
        %v467 = vld [vmem:[%s1 + $0x190] sm:$0xff]
        %v468 = vld [vmem:[%s1 + $0x198] sm:$0xff]
        %v469 = vld [vmem:[%s1 + $0x1a0] sm:$0xff]
        %v470 = vld [vmem:[%s1 + $0x1a8] sm:$0xff]
        %v471 = vld [vmem:[%s1 + $0x1b0] sm:$0xff]
        %v472 = vld [vmem:[%s1 + $0x1b8] sm:$0xff]
        %v473 = vld [vmem:[%s1 + $0x1c0] sm:$0xff]
        %v474 = vld [vmem:[%s1 + $0x1c8] sm:$0xff]
        %v475 = vld [vmem:[%s1 + $0x1d0] sm:$0xff]
        %v476 = vld [vmem:[%s1 + $0x1d8] sm:$0xff]
        %v477 = vld [vmem:[%s1 + $0x1e0] sm:$0xff]
        %v478 = vld [vmem:[%s1 + $0x1e8] sm:$0xff]
        %v479 = vld [vmem:[%s1 + $0x1f0] sm:$0xff]
        %v480 = vld [vmem:[%s1 + $0x1f8] sm:$0xff]
        %v481 = vld [vmem:[%s1 + $0x200] sm:$0xff]
        %v482 = vld [vmem:[%s1 + $0x208] sm:$0xff]
        %v483 = vld [vmem:[%s1 + $0x210] sm:$0xff]
        %v484 = vld [vmem:[%s1 + $0x218] sm:$0xff]
        %v485 = vld [vmem:[%s1 + $0x220] sm:$0xff]
        %v486 = vld [vmem:[%s1 + $0x228] sm:$0xff]
        %v487 = vld [vmem:[%s1 + $0x230] sm:$0xff]
        %v488 = vld [vmem:[%s1 + $0x238] sm:$0xff]
        %v489 = vld [vmem:[%s1 + $0x240] sm:$0xff]
        %v490 = vld [vmem:[%s1 + $0x248] sm:$0xff]
        %v491 = vld [vmem:[%s1 + $0x250] sm:$0xff]
        %v492 = vld [vmem:[%s1 + $0x258] sm:$0xff]
        %v493 = vld [vmem:[%s1 + $0x260] sm:$0xff]
        %v494 = vld [vmem:[%s1 + $0x268] sm:$0xff]
        %v495 = vld [vmem:[%s1 + $0x270] sm:$0xff]
        %v496 = vld [vmem:[%s1 + $0x278] sm:$0xff]
        %v497 = vld [vmem:[%s1 + $0x280] sm:$0xff]
        %v498 = vld [vmem:[%s1 + $0x288] sm:$0xff]
        %v499 = vld [vmem:[%s1 + $0x290] sm:$0xff]
        %v500 = vld [vmem:[%s1 + $0x298] sm:$0xff]
        %v501 = vld [vmem:[%s1 + $0x2a0] sm:$0xff]
        %v502 = vld [vmem:[%s1 + $0x2a8] sm:$0xff]
        %v503 = vld [vmem:[%s1 + $0x2b0] sm:$0xff]
        %v504 = vld [vmem:[%s1 + $0x2b8] sm:$0xff]
        %v505 = vld [vmem:[%s1 + $0x2c0] sm:$0xff]
        %v506 = vld [vmem:[%s1 + $0x2c8] sm:$0xff]
        %v507 = vld [vmem:[%s1 + $0x2d0] sm:$0xff]
        %v508 = vld [vmem:[%s1 + $0x2d8] sm:$0xff]
        %v509 = vld [vmem:[%s1 + $0x2e0] sm:$0xff]
        %v510 = vld [vmem:[%s1 + $0x2e8] sm:$0xff]
        %v511 = vld [vmem:[%s1 + $0x2f0] sm:$0xff]
        %v512 = vld [vmem:[%s1 + $0x2f8] sm:$0xff]
        %v513 = vld [vmem:[%s1 + $0x300] sm:$0xff]
        %v514 = vld [vmem:[%s1 + $0x308] sm:$0xff]
        %v515 = vld [vmem:[%s1 + $0x310] sm:$0xff]
        %v516 = vld [vmem:[%s1 + $0x318] sm:$0xff]
        %v517 = vld [vmem:[%s1 + $0x320] sm:$0xff]
        %v518 = vld [vmem:[%s1 + $0x328] sm:$0xff]
        %v519 = vld [vmem:[%s1 + $0x330] sm:$0xff]
        %v520 = vld [vmem:[%s1 + $0x338] sm:$0xff]
        %v521 = vld [vmem:[%s1 + $0x340] sm:$0xff]
        %v522 = vld [vmem:[%s1 + $0x348] sm:$0xff]
        %v523 = vld [vmem:[%s1 + $0x350] sm:$0xff]
        %v524 = vld [vmem:[%s1 + $0x358] sm:$0xff]
        %v525 = vld [vmem:[%s1 + $0x360] sm:$0xff]
        %v526 = vld [vmem:[%s1 + $0x368] sm:$0xff]
        %v527 = vld [vmem:[%s1 + $0x370] sm:$0xff]
        %v528 = vld [vmem:[%s1 + $0x378] sm:$0xff]
        %v529 = vld [vmem:[%s1 + $0x380] sm:$0xff]
        %v530 = vld [vmem:[%s1 + $0x388] sm:$0xff]
        %v531 = vld [vmem:[%s1 + $0x390] sm:$0xff]
        %v532 = vld [vmem:[%s1 + $0x398] sm:$0xff]
        %v533 = vld [vmem:[%s1 + $0x3a0] sm:$0xff]
        %v534 = vld [vmem:[%s1 + $0x3a8] sm:$0xff]
        %v535 = vld [vmem:[%s1 + $0x3b0] sm:$0xff]
        %v536 = vld [vmem:[%s1 + $0x3b8] sm:$0xff]
        %v537 = vld [vmem:[%s1 + $0x3c0] sm:$0xff]
        %v538 = vld [vmem:[%s1 + $0x3c8] sm:$0xff]
        %v539 = vld [vmem:[%s1 + $0x3d0] sm:$0xff]
        %v540 = vld [vmem:[%s1 + $0x3d8] sm:$0xff]
        %v541 = vld [vmem:[%s1 + $0x3e0] sm:$0xff]
        %v542 = vld [vmem:[%s1 + $0x3e8] sm:$0xff]
        %v543 = vld [vmem:[%s1 + $0x3f0] sm:$0xff]
        %v544 = vld [vmem:[%s1 + $0x3f8] sm:$0xff]
        %v545 = vld [vmem:[%s1 + $0x400] sm:$0xff]
        %v546 = vld [vmem:[%s1 + $0x408] sm:$0xff]
        %v547 = vld [vmem:[%s1 + $0x410] sm:$0xff]
        %v548 = vld [vmem:[%s1 + $0x418] sm:$0xff]
        %v549 = vld [vmem:[%s1 + $0x420] sm:$0xff]
        %v550 = vld [vmem:[%s1 + $0x428] sm:$0xff]
        %v551 = vld [vmem:[%s1 + $0x430] sm:$0xff]
        %v552 = vld [vmem:[%s1 + $0x438] sm:$0xff]
        %v553 = vld [vmem:[%s1 + $0x440] sm:$0xff]
        %v554 = vld [vmem:[%s1 + $0x448] sm:$0xff]
        %v555 = vld [vmem:[%s1 + $0x450] sm:$0xff]
        %v556 = vld [vmem:[%s1 + $0x458] sm:$0xff]
        %v557 = vld [vmem:[%s1 + $0x460] sm:$0xff]
        %v558 = vld [vmem:[%s1 + $0x468] sm:$0xff]
        %v559 = vld [vmem:[%s1 + $0x470] sm:$0xff]
        %v560 = vld [vmem:[%s1 + $0x478] sm:$0xff]
        %v561 = vld [vmem:[%s3] sm:$0x1]
        %v562 = vperm.slane %v561, 0
        %563 = vmatpush.msra.mxu0 %v432
        %564 = vmatpush.msra.mxu0 %v431
        %565 = vmatpush.msra.mxu0 %v430
        %566 = vmatpush.msra.mxu0 %v429
        %567 = vmatpush.msra.mxu0 %v428
        %568 = vmatpush.msra.mxu0 %v427
        %569 = vmatpush.msra.mxu0 %v426
        %570 = vmatpush.msra.mxu0 %v425
        %571 = vmatpush.msra.mxu0 %v424
        %572 = vmatpush.msra.mxu0 %v423
        %573 = vmatpush.msra.mxu0 %v422
        %574 = vmatpush.msra.mxu0 %v421
        %575 = vmatpush.msra.mxu0 %v420
        %576 = vmatpush.msra.mxu0 %v419
        %577 = vmatpush.msra.mxu0 %v418
        %578 = vmatpush.msra.mxu0 %v417
        %579 = vmatmul.f32.gmra.mxu0 %v231
        %v580 = vpop.f32.mrf.mxu0
        %v581 = vadd.f32 %v562, %v580
        %582 = vmatmul.f32.gmra.mxu0 %v232
        %v583 = vpop.f32.mrf.mxu0
        %v584 = vadd.f32 %v562, %v583
        %585 = vmatmul.f32.gmra.mxu0 %v233
        %v586 = vpop.f32.mrf.mxu0
        %v587 = vadd.f32 %v562, %v586
        %588 = vmatmul.f32.gmra.mxu0 %v234
        %v589 = vpop.f32.mrf.mxu0
        %v590 = vadd.f32 %v562, %v589
        %591 = vmatmul.f32.gmra.mxu0 %v235
        %v592 = vpop.f32.mrf.mxu0
        %v593 = vadd.f32 %v562, %v592
        %594 = vmatmul.f32.gmra.mxu0 %v236
        %v595 = vpop.f32.mrf.mxu0
        %v596 = vadd.f32 %v562, %v595
        %597 = vmatmul.f32.gmra.mxu0 %v237
        %v598 = vpop.f32.mrf.mxu0
        %v599 = vadd.f32 %v562, %v598
        %600 = vmatmul.f32.gmra.mxu0 %v238
        %v601 = vpop.f32.mrf.mxu0
        %v602 = vadd.f32 %v562, %v601
        %603 = vmatmul.f32.gmra.mxu0 %v239
        %v604 = vpop.f32.mrf.mxu0
        %v605 = vadd.f32 %v562, %v604
        %606 = vmatmul.f32.gmra.mxu0 %v240
        %v607 = vpop.f32.mrf.mxu0
        %v608 = vadd.f32 %v562, %v607
        %609 = vmatmul.f32.gmra.mxu0 %v241
        %v610 = vpop.f32.mrf.mxu0
        %v611 = vadd.f32 %v562, %v610
        %612 = vmatmul.f32.gmra.mxu0 %v242
        %v613 = vpop.f32.mrf.mxu0
        %v614 = vadd.f32 %v562, %v613
        %615 = vmatmul.f32.gmra.mxu0 %v243
        %v616 = vpop.f32.mrf.mxu0
        %v617 = vadd.f32 %v562, %v616
        %618 = vmatmul.f32.gmra.mxu0 %v244
        %v619 = vpop.f32.mrf.mxu0
        %v620 = vadd.f32 %v562, %v619
        %621 = vmatmul.f32.gmra.mxu0 %v245
        %v622 = vpop.f32.mrf.mxu0
        %v623 = vadd.f32 %v562, %v622
        %624 = vmatmul.f32.gmra.mxu0 %v246
        %v625 = vpop.f32.mrf.mxu0
        %v626 = vadd.f32 %v562, %v625
        %627 = vmatmul.f32.gmra.mxu0 %v247
        %v628 = vpop.f32.mrf.mxu0
        %v629 = vadd.f32 %v562, %v628
        %630 = vmatmul.f32.gmra.mxu0 %v248
        %v631 = vpop.f32.mrf.mxu0
        %v632 = vadd.f32 %v562, %v631
        %633 = vmatmul.f32.gmra.mxu0 %v249
        %v634 = vpop.f32.mrf.mxu0
        %v635 = vadd.f32 %v562, %v634
        %636 = vmatmul.f32.gmra.mxu0 %v250
        %v637 = vpop.f32.mrf.mxu0
        %v638 = vadd.f32 %v562, %v637
        %639 = vdwg.mxu0
        %640 = vmatpush.msra.mxu0 %v448
        %641 = vmatpush.msra.mxu0 %v447
        %642 = vmatpush.msra.mxu0 %v446
        %643 = vmatpush.msra.mxu0 %v445
        %644 = vmatpush.msra.mxu0 %v444
        %645 = vmatpush.msra.mxu0 %v443
        %646 = vmatpush.msra.mxu0 %v442
        %647 = vmatpush.msra.mxu0 %v441
        %648 = vmatpush.msra.mxu0 %v440
        %649 = vmatpush.msra.mxu0 %v439
        %650 = vmatpush.msra.mxu0 %v438
        %651 = vmatpush.msra.mxu0 %v437
        %652 = vmatpush.msra.mxu0 %v436
        %653 = vmatpush.msra.mxu0 %v435
        %654 = vmatpush.msra.mxu0 %v434
        %655 = vmatpush.msra.mxu0 %v433
        %656 = vmatmul.f32.gmra.mxu0 %v251
        %v657 = vpop.f32.mrf.mxu0
        %v658 = vadd.f32 %v581, %v657
        %659 = vmatmul.f32.gmra.mxu0 %v252
        %v660 = vpop.f32.mrf.mxu0
        %v661 = vadd.f32 %v584, %v660
        %662 = vmatmul.f32.gmra.mxu0 %v253
        %v663 = vpop.f32.mrf.mxu0
        %v664 = vadd.f32 %v587, %v663
        %665 = vmatmul.f32.gmra.mxu0 %v254
        %v666 = vpop.f32.mrf.mxu0
        %v667 = vadd.f32 %v590, %v666
        %668 = vmatmul.f32.gmra.mxu0 %v255
        %v669 = vpop.f32.mrf.mxu0
        %v670 = vadd.f32 %v593, %v669
        %671 = vmatmul.f32.gmra.mxu0 %v256
        %v672 = vpop.f32.mrf.mxu0
        %v673 = vadd.f32 %v596, %v672
        %674 = vmatmul.f32.gmra.mxu0 %v257
        %v675 = vpop.f32.mrf.mxu0
        %v676 = vadd.f32 %v599, %v675
        %677 = vmatmul.f32.gmra.mxu0 %v258
        %v678 = vpop.f32.mrf.mxu0
        %v679 = vadd.f32 %v602, %v678
        %680 = vmatmul.f32.gmra.mxu0 %v259
        %v681 = vpop.f32.mrf.mxu0
        %v682 = vadd.f32 %v605, %v681
        %683 = vmatmul.f32.gmra.mxu0 %v260
        %v684 = vpop.f32.mrf.mxu0
        %v685 = vadd.f32 %v608, %v684
        %686 = vmatmul.f32.gmra.mxu0 %v261
        %v687 = vpop.f32.mrf.mxu0
        %v688 = vadd.f32 %v611, %v687
        %689 = vmatmul.f32.gmra.mxu0 %v262
        %v690 = vpop.f32.mrf.mxu0
        %v691 = vadd.f32 %v614, %v690
        %692 = vmatmul.f32.gmra.mxu0 %v263
        %v693 = vpop.f32.mrf.mxu0
        %v694 = vadd.f32 %v617, %v693
        %695 = vmatmul.f32.gmra.mxu0 %v264
        %v696 = vpop.f32.mrf.mxu0
        %v697 = vadd.f32 %v620, %v696
        %698 = vmatmul.f32.gmra.mxu0 %v265
        %v699 = vpop.f32.mrf.mxu0
        %v700 = vadd.f32 %v623, %v699
        %701 = vmatmul.f32.gmra.mxu0 %v266
        %v702 = vpop.f32.mrf.mxu0
        %v703 = vadd.f32 %v626, %v702
        %704 = vmatmul.f32.gmra.mxu0 %v267
        %v705 = vpop.f32.mrf.mxu0
        %v706 = vadd.f32 %v629, %v705
        %707 = vmatmul.f32.gmra.mxu0 %v268
        %v708 = vpop.f32.mrf.mxu0
        %v709 = vadd.f32 %v632, %v708
        %710 = vmatmul.f32.gmra.mxu0 %v269
        %v711 = vpop.f32.mrf.mxu0
        %v712 = vadd.f32 %v635, %v711
        %713 = vmatmul.f32.gmra.mxu0 %v270
        %v714 = vpop.f32.mrf.mxu0
        %v715 = vadd.f32 %v638, %v714
        %716 = vdwg.mxu0
        %717 = vmatpush.msra.mxu0 %v464
        %718 = vmatpush.msra.mxu0 %v463
        %719 = vmatpush.msra.mxu0 %v462
        %720 = vmatpush.msra.mxu0 %v461
        %721 = vmatpush.msra.mxu0 %v460
        %722 = vmatpush.msra.mxu0 %v459
        %723 = vmatpush.msra.mxu0 %v458
        %724 = vmatpush.msra.mxu0 %v457
        %725 = vmatpush.msra.mxu0 %v456
        %726 = vmatpush.msra.mxu0 %v455
        %727 = vmatpush.msra.mxu0 %v454
        %728 = vmatpush.msra.mxu0 %v453
        %729 = vmatpush.msra.mxu0 %v452
        %730 = vmatpush.msra.mxu0 %v451
        %731 = vmatpush.msra.mxu0 %v450
        %732 = vmatpush.msra.mxu0 %v449
        %733 = vmatmul.f32.gmra.mxu0 %v271
        %v734 = vpop.f32.mrf.mxu0
        %v735 = vadd.f32 %v658, %v734
        %736 = vmatmul.f32.gmra.mxu0 %v272
        %v737 = vpop.f32.mrf.mxu0
        %v738 = vadd.f32 %v661, %v737
        %739 = vmatmul.f32.gmra.mxu0 %v273
        %v740 = vpop.f32.mrf.mxu0
        %v741 = vadd.f32 %v664, %v740
        %742 = vmatmul.f32.gmra.mxu0 %v274
        %v743 = vpop.f32.mrf.mxu0
        %v744 = vadd.f32 %v667, %v743
        %745 = vmatmul.f32.gmra.mxu0 %v275
        %v746 = vpop.f32.mrf.mxu0
        %v747 = vadd.f32 %v670, %v746
        %748 = vmatmul.f32.gmra.mxu0 %v276
        %v749 = vpop.f32.mrf.mxu0
        %v750 = vadd.f32 %v673, %v749
        %751 = vmatmul.f32.gmra.mxu0 %v277
        %v752 = vpop.f32.mrf.mxu0
        %v753 = vadd.f32 %v676, %v752
        %754 = vmatmul.f32.gmra.mxu0 %v278
        %v755 = vpop.f32.mrf.mxu0
        %v756 = vadd.f32 %v679, %v755
        %757 = vmatmul.f32.gmra.mxu0 %v279
        %v758 = vpop.f32.mrf.mxu0
        %v759 = vadd.f32 %v682, %v758
        %760 = vmatmul.f32.gmra.mxu0 %v280
        %v761 = vpop.f32.mrf.mxu0
        %v762 = vadd.f32 %v685, %v761
        %763 = vmatmul.f32.gmra.mxu0 %v281
        %v764 = vpop.f32.mrf.mxu0
        %v765 = vadd.f32 %v688, %v764
        %766 = vmatmul.f32.gmra.mxu0 %v282
        %v767 = vpop.f32.mrf.mxu0
        %v768 = vadd.f32 %v691, %v767
        %769 = vmatmul.f32.gmra.mxu0 %v283
        %v770 = vpop.f32.mrf.mxu0
        %v771 = vadd.f32 %v694, %v770
        %772 = vmatmul.f32.gmra.mxu0 %v284
        %v773 = vpop.f32.mrf.mxu0
        %v774 = vadd.f32 %v697, %v773
        %775 = vmatmul.f32.gmra.mxu0 %v285
        %v776 = vpop.f32.mrf.mxu0
        %v777 = vadd.f32 %v700, %v776
        %778 = vmatmul.f32.gmra.mxu0 %v286
        %v779 = vpop.f32.mrf.mxu0
        %v780 = vadd.f32 %v703, %v779
        %781 = vmatmul.f32.gmra.mxu0 %v287
        %v782 = vpop.f32.mrf.mxu0
        %v783 = vadd.f32 %v706, %v782
        %784 = vmatmul.f32.gmra.mxu0 %v288
        %v785 = vpop.f32.mrf.mxu0
        %v786 = vadd.f32 %v709, %v785
        %787 = vmatmul.f32.gmra.mxu0 %v289
        %v788 = vpop.f32.mrf.mxu0
        %v789 = vadd.f32 %v712, %v788
        %790 = vmatmul.f32.gmra.mxu0 %v290
        %v791 = vpop.f32.mrf.mxu0
        %v792 = vadd.f32 %v715, %v791
        %793 = vdwg.mxu0
        %794 = vmatpush.msra.mxu0 %v480
        %795 = vmatpush.msra.mxu0 %v479
        %796 = vmatpush.msra.mxu0 %v478
        %797 = vmatpush.msra.mxu0 %v477
        %798 = vmatpush.msra.mxu0 %v476
        %799 = vmatpush.msra.mxu0 %v475
        %800 = vmatpush.msra.mxu0 %v474
        %801 = vmatpush.msra.mxu0 %v473
        %802 = vmatpush.msra.mxu0 %v472
        %803 = vmatpush.msra.mxu0 %v471
        %804 = vmatpush.msra.mxu0 %v470
        %805 = vmatpush.msra.mxu0 %v469
        %806 = vmatpush.msra.mxu0 %v468
        %807 = vmatpush.msra.mxu0 %v467
        %808 = vmatpush.msra.mxu0 %v466
        %809 = vmatpush.msra.mxu0 %v465
        %810 = vmatmul.f32.gmra.mxu0 %v294
        %v811 = vpop.f32.mrf.mxu0
        %v812 = vadd.f32 %v735, %v811
        %813 = vmatmul.f32.gmra.mxu0 %v295
        %v814 = vpop.f32.mrf.mxu0
        %v815 = vadd.f32 %v738, %v814
        %816 = vmatmul.f32.gmra.mxu0 %v296
        %v817 = vpop.f32.mrf.mxu0
        %v818 = vadd.f32 %v741, %v817
        %819 = vmatmul.f32.gmra.mxu0 %v297
        %v820 = vpop.f32.mrf.mxu0
        %v821 = vadd.f32 %v744, %v820
        %822 = vmatmul.f32.gmra.mxu0 %v298
        %v823 = vpop.f32.mrf.mxu0
        %v824 = vadd.f32 %v747, %v823
        %825 = vmatmul.f32.gmra.mxu0 %v299
        %v826 = vpop.f32.mrf.mxu0
        %v827 = vadd.f32 %v750, %v826
        %828 = vmatmul.f32.gmra.mxu0 %v300
        %v829 = vpop.f32.mrf.mxu0
        %v830 = vadd.f32 %v753, %v829
        %831 = vmatmul.f32.gmra.mxu0 %v301
        %v832 = vpop.f32.mrf.mxu0
        %v833 = vadd.f32 %v756, %v832
        %834 = vmatmul.f32.gmra.mxu0 %v302
        %v835 = vpop.f32.mrf.mxu0
        %v836 = vadd.f32 %v759, %v835
        %837 = vmatmul.f32.gmra.mxu0 %v303
        %v838 = vpop.f32.mrf.mxu0
        %v839 = vadd.f32 %v762, %v838
        %840 = vmatmul.f32.gmra.mxu0 %v304
        %v841 = vpop.f32.mrf.mxu0
        %v842 = vadd.f32 %v765, %v841
        %843 = vmatmul.f32.gmra.mxu0 %v305
        %v844 = vpop.f32.mrf.mxu0
        %v845 = vadd.f32 %v768, %v844
        %846 = vmatmul.f32.gmra.mxu0 %v306
        %v847 = vpop.f32.mrf.mxu0
        %v848 = vadd.f32 %v771, %v847
        %849 = vmatmul.f32.gmra.mxu0 %v307
        %v850 = vpop.f32.mrf.mxu0
        %v851 = vadd.f32 %v774, %v850
        %852 = vmatmul.f32.gmra.mxu0 %v308
        %v853 = vpop.f32.mrf.mxu0
        %v854 = vadd.f32 %v777, %v853
        %855 = vmatmul.f32.gmra.mxu0 %v309
        %v856 = vpop.f32.mrf.mxu0
        %v857 = vadd.f32 %v780, %v856
        %858 = vmatmul.f32.gmra.mxu0 %v310
        %v859 = vpop.f32.mrf.mxu0
        %v860 = vadd.f32 %v783, %v859
        %861 = vmatmul.f32.gmra.mxu0 %v311
        %v862 = vpop.f32.mrf.mxu0
        %v863 = vadd.f32 %v786, %v862
        %864 = vmatmul.f32.gmra.mxu0 %v312
        %v865 = vpop.f32.mrf.mxu0
        %v866 = vadd.f32 %v789, %v865
        %867 = vmatmul.f32.gmra.mxu0 %v313
        %v868 = vpop.f32.mrf.mxu0
        %v869 = vadd.f32 %v792, %v868
        %870 = vdwg.mxu0
        %871 = vmatpush.msra.mxu0 %v496
        %872 = vmatpush.msra.mxu0 %v495
        %873 = vmatpush.msra.mxu0 %v494
        %874 = vmatpush.msra.mxu0 %v493
        %875 = vmatpush.msra.mxu0 %v492
        %876 = vmatpush.msra.mxu0 %v491
        %877 = vmatpush.msra.mxu0 %v490
        %878 = vmatpush.msra.mxu0 %v489
        %879 = vmatpush.msra.mxu0 %v488
        %880 = vmatpush.msra.mxu0 %v487
        %881 = vmatpush.msra.mxu0 %v486
        %882 = vmatpush.msra.mxu0 %v485
        %883 = vmatpush.msra.mxu0 %v484
        %884 = vmatpush.msra.mxu0 %v483
        %885 = vmatpush.msra.mxu0 %v482
        %886 = vmatpush.msra.mxu0 %v481
        %887 = vmatmul.f32.gmra.mxu0 %v314
        %v888 = vpop.f32.mrf.mxu0
        %v889 = vadd.f32 %v812, %v888
        %890 = vmatmul.f32.gmra.mxu0 %v315
        %v891 = vpop.f32.mrf.mxu0
        %v892 = vadd.f32 %v815, %v891
        %893 = vmatmul.f32.gmra.mxu0 %v316
        %v894 = vpop.f32.mrf.mxu0
        %v895 = vadd.f32 %v818, %v894
        %896 = vmatmul.f32.gmra.mxu0 %v317
        %v897 = vpop.f32.mrf.mxu0
        %v898 = vadd.f32 %v821, %v897
        %899 = vmatmul.f32.gmra.mxu0 %v318
        %v900 = vpop.f32.mrf.mxu0
        %v901 = vadd.f32 %v824, %v900
        %902 = vmatmul.f32.gmra.mxu0 %v319
        %v903 = vpop.f32.mrf.mxu0
        %v904 = vadd.f32 %v827, %v903
        %905 = vmatmul.f32.gmra.mxu0 %v320
        %v906 = vpop.f32.mrf.mxu0
        %v907 = vadd.f32 %v830, %v906
        %908 = vmatmul.f32.gmra.mxu0 %v321
        %v909 = vpop.f32.mrf.mxu0
        %v910 = vadd.f32 %v833, %v909
        %911 = vmatmul.f32.gmra.mxu0 %v322
        %v912 = vpop.f32.mrf.mxu0
        %v913 = vadd.f32 %v836, %v912
        %914 = vmatmul.f32.gmra.mxu0 %v323
        %v915 = vpop.f32.mrf.mxu0
        %v916 = vadd.f32 %v839, %v915
        %917 = vmatmul.f32.gmra.mxu0 %v324
        %v918 = vpop.f32.mrf.mxu0
        %v919 = vadd.f32 %v842, %v918
        %920 = vmatmul.f32.gmra.mxu0 %v325
        %v921 = vpop.f32.mrf.mxu0
        %v922 = vadd.f32 %v845, %v921
        %923 = vmatmul.f32.gmra.mxu0 %v326
        %v924 = vpop.f32.mrf.mxu0
        %v925 = vadd.f32 %v848, %v924
        %926 = vmatmul.f32.gmra.mxu0 %v327
        %v927 = vpop.f32.mrf.mxu0
        %v928 = vadd.f32 %v851, %v927
        %929 = vmatmul.f32.gmra.mxu0 %v328
        %v930 = vpop.f32.mrf.mxu0
        %v931 = vadd.f32 %v854, %v930
        %932 = vmatmul.f32.gmra.mxu0 %v329
        %v933 = vpop.f32.mrf.mxu0
        %v934 = vadd.f32 %v857, %v933
        %935 = vmatmul.f32.gmra.mxu0 %v330
        %v936 = vpop.f32.mrf.mxu0
        %v937 = vadd.f32 %v860, %v936
        %938 = vmatmul.f32.gmra.mxu0 %v331
        %v939 = vpop.f32.mrf.mxu0
        %v940 = vadd.f32 %v863, %v939
        %941 = vmatmul.f32.gmra.mxu0 %v332
        %v942 = vpop.f32.mrf.mxu0
        %v943 = vadd.f32 %v866, %v942
        %944 = vmatmul.f32.gmra.mxu0 %v333
        %v945 = vpop.f32.mrf.mxu0
        %v946 = vadd.f32 %v869, %v945
        %947 = vdwg.mxu0
        %948 = vmatpush.msra.mxu0 %v512
        %949 = vmatpush.msra.mxu0 %v511
        %950 = vmatpush.msra.mxu0 %v510
        %951 = vmatpush.msra.mxu0 %v509
        %952 = vmatpush.msra.mxu0 %v508
        %953 = vmatpush.msra.mxu0 %v507
        %954 = vmatpush.msra.mxu0 %v506
        %955 = vmatpush.msra.mxu0 %v505
        %956 = vmatpush.msra.mxu0 %v504
        %957 = vmatpush.msra.mxu0 %v503
        %958 = vmatpush.msra.mxu0 %v502
        %959 = vmatpush.msra.mxu0 %v501
        %960 = vmatpush.msra.mxu0 %v500
        %961 = vmatpush.msra.mxu0 %v499
        %962 = vmatpush.msra.mxu0 %v498
        %963 = vmatpush.msra.mxu0 %v497
        %964 = vmatmul.f32.gmra.mxu0 %v334
        %v965 = vpop.f32.mrf.mxu0
        %v966 = vadd.f32 %v889, %v965
        %967 = vmatmul.f32.gmra.mxu0 %v335
        %v968 = vpop.f32.mrf.mxu0
        %v969 = vadd.f32 %v892, %v968
        %970 = vmatmul.f32.gmra.mxu0 %v336
        %v971 = vpop.f32.mrf.mxu0
        %v972 = vadd.f32 %v895, %v971
        %973 = vmatmul.f32.gmra.mxu0 %v337
        %v974 = vpop.f32.mrf.mxu0
        %v975 = vadd.f32 %v898, %v974
        %976 = vmatmul.f32.gmra.mxu0 %v338
        %v977 = vpop.f32.mrf.mxu0
        %v978 = vadd.f32 %v901, %v977
        %979 = vmatmul.f32.gmra.mxu0 %v339
        %v980 = vpop.f32.mrf.mxu0
        %v981 = vadd.f32 %v904, %v980
        %982 = vmatmul.f32.gmra.mxu0 %v340
        %v983 = vpop.f32.mrf.mxu0
        %v984 = vadd.f32 %v907, %v983
        %985 = vmatmul.f32.gmra.mxu0 %v341
        %v986 = vpop.f32.mrf.mxu0
        %v987 = vadd.f32 %v910, %v986
        %988 = vmatmul.f32.gmra.mxu0 %v342
        %v989 = vpop.f32.mrf.mxu0
        %v990 = vadd.f32 %v913, %v989
        %991 = vmatmul.f32.gmra.mxu0 %v343
        %v992 = vpop.f32.mrf.mxu0
        %v993 = vadd.f32 %v916, %v992
        %994 = vmatmul.f32.gmra.mxu0 %v344
        %v995 = vpop.f32.mrf.mxu0
        %v996 = vadd.f32 %v919, %v995
        %997 = vmatmul.f32.gmra.mxu0 %v345
        %v998 = vpop.f32.mrf.mxu0
        %v999 = vadd.f32 %v922, %v998
        %1000 = vmatmul.f32.gmra.mxu0 %v346
        %v1001 = vpop.f32.mrf.mxu0
        %v1002 = vadd.f32 %v925, %v1001
        %1003 = vmatmul.f32.gmra.mxu0 %v347
        %v1004 = vpop.f32.mrf.mxu0
        %v1005 = vadd.f32 %v928, %v1004
        %1006 = vmatmul.f32.gmra.mxu0 %v348
        %v1007 = vpop.f32.mrf.mxu0
        %v1008 = vadd.f32 %v931, %v1007
        %1009 = vmatmul.f32.gmra.mxu0 %v349
        %v1010 = vpop.f32.mrf.mxu0
        %v1011 = vadd.f32 %v934, %v1010
        %1012 = vmatmul.f32.gmra.mxu0 %v350
        %v1013 = vpop.f32.mrf.mxu0
        %v1014 = vadd.f32 %v937, %v1013
        %1015 = vmatmul.f32.gmra.mxu0 %v351
        %v1016 = vpop.f32.mrf.mxu0
        %v1017 = vadd.f32 %v940, %v1016
        %1018 = vmatmul.f32.gmra.mxu0 %v352
        %v1019 = vpop.f32.mrf.mxu0
        %v1020 = vadd.f32 %v943, %v1019
        %1021 = vmatmul.f32.gmra.mxu0 %v353
        %v1022 = vpop.f32.mrf.mxu0
        %v1023 = vadd.f32 %v946, %v1022
        %1024 = vdwg.mxu0
        %1025 = vmatpush.msra.mxu0 %v528
        %1026 = vmatpush.msra.mxu0 %v527
        %1027 = vmatpush.msra.mxu0 %v526
        %1028 = vmatpush.msra.mxu0 %v525
        %1029 = vmatpush.msra.mxu0 %v524
        %1030 = vmatpush.msra.mxu0 %v523
        %1031 = vmatpush.msra.mxu0 %v522
        %1032 = vmatpush.msra.mxu0 %v521
        %1033 = vmatpush.msra.mxu0 %v520
        %1034 = vmatpush.msra.mxu0 %v519
        %1035 = vmatpush.msra.mxu0 %v518
        %1036 = vmatpush.msra.mxu0 %v517
        %1037 = vmatpush.msra.mxu0 %v516
        %1038 = vmatpush.msra.mxu0 %v515
        %1039 = vmatpush.msra.mxu0 %v514
        %1040 = vmatpush.msra.mxu0 %v513
        %1041 = vmatmul.f32.gmra.mxu0 %v357
        %v1042 = vpop.f32.mrf.mxu0
        %v1043 = vadd.f32 %v966, %v1042
        %1044 = vmatmul.f32.gmra.mxu0 %v358
        %v1045 = vpop.f32.mrf.mxu0
        %v1046 = vadd.f32 %v969, %v1045
        %1047 = vmatmul.f32.gmra.mxu0 %v359
        %v1048 = vpop.f32.mrf.mxu0
        %v1049 = vadd.f32 %v972, %v1048
        %1050 = vmatmul.f32.gmra.mxu0 %v360
        %v1051 = vpop.f32.mrf.mxu0
        %v1052 = vadd.f32 %v975, %v1051
        %1053 = vmatmul.f32.gmra.mxu0 %v361
        %v1054 = vpop.f32.mrf.mxu0
        %v1055 = vadd.f32 %v978, %v1054
        %1056 = vmatmul.f32.gmra.mxu0 %v362
        %v1057 = vpop.f32.mrf.mxu0
        %v1058 = vadd.f32 %v981, %v1057
        %1059 = vmatmul.f32.gmra.mxu0 %v363
        %v1060 = vpop.f32.mrf.mxu0
        %v1061 = vadd.f32 %v984, %v1060
        %1062 = vmatmul.f32.gmra.mxu0 %v364
        %v1063 = vpop.f32.mrf.mxu0
        %v1064 = vadd.f32 %v987, %v1063
        %1065 = vmatmul.f32.gmra.mxu0 %v365
        %v1066 = vpop.f32.mrf.mxu0
        %v1067 = vadd.f32 %v990, %v1066
        %1068 = vmatmul.f32.gmra.mxu0 %v366
        %v1069 = vpop.f32.mrf.mxu0
        %v1070 = vadd.f32 %v993, %v1069
        %1071 = vmatmul.f32.gmra.mxu0 %v367
        %v1072 = vpop.f32.mrf.mxu0
        %v1073 = vadd.f32 %v996, %v1072
        %1074 = vmatmul.f32.gmra.mxu0 %v368
        %v1075 = vpop.f32.mrf.mxu0
        %v1076 = vadd.f32 %v999, %v1075
        %1077 = vmatmul.f32.gmra.mxu0 %v369
        %v1078 = vpop.f32.mrf.mxu0
        %v1079 = vadd.f32 %v1002, %v1078
        %1080 = vmatmul.f32.gmra.mxu0 %v370
        %v1081 = vpop.f32.mrf.mxu0
        %v1082 = vadd.f32 %v1005, %v1081
        %1083 = vmatmul.f32.gmra.mxu0 %v371
        %v1084 = vpop.f32.mrf.mxu0
        %v1085 = vadd.f32 %v1008, %v1084
        %1086 = vmatmul.f32.gmra.mxu0 %v372
        %v1087 = vpop.f32.mrf.mxu0
        %v1088 = vadd.f32 %v1011, %v1087
        %1089 = vmatmul.f32.gmra.mxu0 %v373
        %v1090 = vpop.f32.mrf.mxu0
        %v1091 = vadd.f32 %v1014, %v1090
        %1092 = vmatmul.f32.gmra.mxu0 %v374
        %v1093 = vpop.f32.mrf.mxu0
        %v1094 = vadd.f32 %v1017, %v1093
        %1095 = vmatmul.f32.gmra.mxu0 %v375
        %v1096 = vpop.f32.mrf.mxu0
        %v1097 = vadd.f32 %v1020, %v1096
        %1098 = vmatmul.f32.gmra.mxu0 %v376
        %v1099 = vpop.f32.mrf.mxu0
        %v1100 = vadd.f32 %v1023, %v1099
        %1101 = vdwg.mxu0
        %1102 = vmatpush.msra.mxu0 %v544
        %1103 = vmatpush.msra.mxu0 %v543
        %1104 = vmatpush.msra.mxu0 %v542
        %1105 = vmatpush.msra.mxu0 %v541
        %1106 = vmatpush.msra.mxu0 %v540
        %1107 = vmatpush.msra.mxu0 %v539
        %1108 = vmatpush.msra.mxu0 %v538
        %1109 = vmatpush.msra.mxu0 %v537
        %1110 = vmatpush.msra.mxu0 %v536
        %1111 = vmatpush.msra.mxu0 %v535
        %1112 = vmatpush.msra.mxu0 %v534
        %1113 = vmatpush.msra.mxu0 %v533
        %1114 = vmatpush.msra.mxu0 %v532
        %1115 = vmatpush.msra.mxu0 %v531
        %1116 = vmatpush.msra.mxu0 %v530
        %1117 = vmatpush.msra.mxu0 %v529
        %1118 = vmatmul.f32.gmra.mxu0 %v377
        %v1119 = vpop.f32.mrf.mxu0
        %v1120 = vadd.f32 %v1043, %v1119
        %1121 = vmatmul.f32.gmra.mxu0 %v378
        %v1122 = vpop.f32.mrf.mxu0
        %v1123 = vadd.f32 %v1046, %v1122
        %1124 = vmatmul.f32.gmra.mxu0 %v379
        %v1125 = vpop.f32.mrf.mxu0
        %v1126 = vadd.f32 %v1049, %v1125
        %1127 = vmatmul.f32.gmra.mxu0 %v380
        %v1128 = vpop.f32.mrf.mxu0
        %v1129 = vadd.f32 %v1052, %v1128
        %1130 = vmatmul.f32.gmra.mxu0 %v381
        %v1131 = vpop.f32.mrf.mxu0
        %v1132 = vadd.f32 %v1055, %v1131
        %1133 = vmatmul.f32.gmra.mxu0 %v382
        %v1134 = vpop.f32.mrf.mxu0
        %v1135 = vadd.f32 %v1058, %v1134
        %1136 = vmatmul.f32.gmra.mxu0 %v383
        %v1137 = vpop.f32.mrf.mxu0
        %v1138 = vadd.f32 %v1061, %v1137
        %1139 = vmatmul.f32.gmra.mxu0 %v384
        %v1140 = vpop.f32.mrf.mxu0
        %v1141 = vadd.f32 %v1064, %v1140
        %1142 = vmatmul.f32.gmra.mxu0 %v385
        %v1143 = vpop.f32.mrf.mxu0
        %v1144 = vadd.f32 %v1067, %v1143
        %1145 = vmatmul.f32.gmra.mxu0 %v386
        %v1146 = vpop.f32.mrf.mxu0
        %v1147 = vadd.f32 %v1070, %v1146
        %1148 = vmatmul.f32.gmra.mxu0 %v387
        %v1149 = vpop.f32.mrf.mxu0
        %v1150 = vadd.f32 %v1073, %v1149
        %1151 = vmatmul.f32.gmra.mxu0 %v388
        %v1152 = vpop.f32.mrf.mxu0
        %v1153 = vadd.f32 %v1076, %v1152
        %1154 = vmatmul.f32.gmra.mxu0 %v389
        %v1155 = vpop.f32.mrf.mxu0
        %v1156 = vadd.f32 %v1079, %v1155
        %1157 = vmatmul.f32.gmra.mxu0 %v390
        %v1158 = vpop.f32.mrf.mxu0
        %v1159 = vadd.f32 %v1082, %v1158
        %1160 = vmatmul.f32.gmra.mxu0 %v391
        %v1161 = vpop.f32.mrf.mxu0
        %v1162 = vadd.f32 %v1085, %v1161
        %1163 = vmatmul.f32.gmra.mxu0 %v392
        %v1164 = vpop.f32.mrf.mxu0
        %v1165 = vadd.f32 %v1088, %v1164
        %1166 = vmatmul.f32.gmra.mxu0 %v393
        %v1167 = vpop.f32.mrf.mxu0
        %v1168 = vadd.f32 %v1091, %v1167
        %1169 = vmatmul.f32.gmra.mxu0 %v394
        %v1170 = vpop.f32.mrf.mxu0
        %v1171 = vadd.f32 %v1094, %v1170
        %1172 = vmatmul.f32.gmra.mxu0 %v395
        %v1173 = vpop.f32.mrf.mxu0
        %v1174 = vadd.f32 %v1097, %v1173
        %1175 = vmatmul.f32.gmra.mxu0 %v396
        %v1176 = vpop.f32.mrf.mxu0
        %v1177 = vadd.f32 %v1100, %v1176
        %1178 = vdwg.mxu0
        %1179 = vmatpush.msra.mxu0 %v560
        %1180 = vmatpush.msra.mxu0 %v559
        %1181 = vmatpush.msra.mxu0 %v558
        %1182 = vmatpush.msra.mxu0 %v557
        %1183 = vmatpush.msra.mxu0 %v556
        %1184 = vmatpush.msra.mxu0 %v555
        %1185 = vmatpush.msra.mxu0 %v554
        %1186 = vmatpush.msra.mxu0 %v553
        %1187 = vmatpush.msra.mxu0 %v552
        %1188 = vmatpush.msra.mxu0 %v551
        %1189 = vmatpush.msra.mxu0 %v550
        %1190 = vmatpush.msra.mxu0 %v549
        %1191 = vmatpush.msra.mxu0 %v548
        %1192 = vmatpush.msra.mxu0 %v547
        %1193 = vmatpush.msra.mxu0 %v546
        %1194 = vmatpush.msra.mxu0 %v545
        %1195 = vmatmul.f32.gmra.mxu0 %v397
        %v1196 = vpop.f32.mrf.mxu0
        %v1197 = vadd.f32 %v1120, %v1196
        %1198 = vmatmul.f32.gmra.mxu0 %v398
        %v1199 = vpop.f32.mrf.mxu0
        %v1200 = vadd.f32 %v1123, %v1199
        %1201 = vmatmul.f32.gmra.mxu0 %v399
        %v1202 = vpop.f32.mrf.mxu0
        %v1203 = vadd.f32 %v1126, %v1202
        %1204 = vmatmul.f32.gmra.mxu0 %v400
        %v1205 = vpop.f32.mrf.mxu0
        %v1206 = vadd.f32 %v1129, %v1205
        %1207 = vmatmul.f32.gmra.mxu0 %v401
        %v1208 = vpop.f32.mrf.mxu0
        %v1209 = vadd.f32 %v1132, %v1208
        %1210 = vmatmul.f32.gmra.mxu0 %v402
        %v1211 = vpop.f32.mrf.mxu0
        %v1212 = vadd.f32 %v1135, %v1211
        %1213 = vmatmul.f32.gmra.mxu0 %v403
        %v1214 = vpop.f32.mrf.mxu0
        %v1215 = vadd.f32 %v1138, %v1214
        %1216 = vmatmul.f32.gmra.mxu0 %v404
        %v1217 = vpop.f32.mrf.mxu0
        %v1218 = vadd.f32 %v1141, %v1217
        %1219 = vmatmul.f32.gmra.mxu0 %v405
        %v1220 = vpop.f32.mrf.mxu0
        %v1221 = vadd.f32 %v1144, %v1220
        %1222 = vmatmul.f32.gmra.mxu0 %v406
        %v1223 = vpop.f32.mrf.mxu0
        %v1224 = vadd.f32 %v1147, %v1223
        %1225 = vmatmul.f32.gmra.mxu0 %v407
        %v1226 = vpop.f32.mrf.mxu0
        %v1227 = vadd.f32 %v1150, %v1226
        %1228 = vmatmul.f32.gmra.mxu0 %v408
        %v1229 = vpop.f32.mrf.mxu0
        %v1230 = vadd.f32 %v1153, %v1229
        %1231 = vmatmul.f32.gmra.mxu0 %v409
        %v1232 = vpop.f32.mrf.mxu0
        %v1233 = vadd.f32 %v1156, %v1232
        %1234 = vmatmul.f32.gmra.mxu0 %v410
        %v1235 = vpop.f32.mrf.mxu0
        %v1236 = vadd.f32 %v1159, %v1235
        %1237 = vmatmul.f32.gmra.mxu0 %v411
        %v1238 = vpop.f32.mrf.mxu0
        %v1239 = vadd.f32 %v1162, %v1238
        %1240 = vmatmul.f32.gmra.mxu0 %v412
        %v1241 = vpop.f32.mrf.mxu0
        %v1242 = vadd.f32 %v1165, %v1241
        %1243 = vmatmul.f32.gmra.mxu0 %v413
        %v1244 = vpop.f32.mrf.mxu0
        %v1245 = vadd.f32 %v1168, %v1244
        %1246 = vmatmul.f32.gmra.mxu0 %v414
        %v1247 = vpop.f32.mrf.mxu0
        %v1248 = vadd.f32 %v1171, %v1247
        %1249 = vmatmul.f32.gmra.mxu0 %v415
        %v1250 = vpop.f32.mrf.mxu0
        %v1251 = vadd.f32 %v1174, %v1250
        %1252 = vmatmul.f32.gmra.mxu0 %v416
        %v1253 = vpop.f32.mrf.mxu0
        %v1254 = vadd.f32 %v1177, %v1253
        %1255 = vdwg.mxu0
        %v1256 = vmax.f32 %v1197, 0.0
        %v1257 = vmax.f32 %v1200, 0.0
        %v1258 = vmax.f32 %v1203, 0.0
        %v1259 = vmax.f32 %v1206, 0.0
        %v1260 = vmax.f32 %v1209, 0.0
        %v1261 = vmax.f32 %v1212, 0.0
        %v1262 = vmax.f32 %v1215, 0.0
        %v1263 = vmax.f32 %v1218, 0.0
        %v1264 = vmax.f32 %v1221, 0.0
        %v1265 = vmax.f32 %v1224, 0.0
        %v1266 = vmax.f32 %v1227, 0.0
        %v1267 = vmax.f32 %v1230, 0.0
        %v1268 = vmax.f32 %v1233, 0.0
        %v1269 = vmax.f32 %v1236, 0.0
        %v1270 = vmax.f32 %v1239, 0.0
        %v1271 = vmax.f32 %v1242, 0.0
        %v1272 = vmax.f32 %v1245, 0.0
        %v1273 = vmax.f32 %v1248, 0.0
        %v1274 = vmax.f32 %v1251, 0.0
        %v1275 = vmax.f32 %v1254, 0.0
        %1276 = vst [vmem:[#allocation2] sm:$0x1] 0.0
        %1277 = vst [vmem:[#allocation2 + $0x18] sm:$0x1] 0.0
        %1278 = vst [vmem:[#allocation2 + $0x30] sm:$0x1] 0.0
        %1279 = vst [vmem:[#allocation2 + $0x48] sm:$0x1] 0.0
        %1280 = vst [vmem:[#allocation2 + $0x60] sm:$0x1] 0.0
        %1281 = vst [vmem:[#allocation2 + $0x78] sm:$0x1] 0.0
        %1282 = vst [vmem:[#allocation2 + $0x90] sm:$0x1] 0.0
        %1283 = vst [vmem:[#allocation2 + $0xa8] sm:$0x1] 0.0
        %1284 = vst [vmem:[#allocation2 + $0xc0] sm:$0x1] 0.0
        %1285 = vst [vmem:[#allocation2 + $0xd8] sm:$0x1] 0.0
        %1286 = vst [vmem:[#allocation2 + $0x11] sm:$0x1] 0.0
        %1287 = vst [vmem:[#allocation2 + $0x29] sm:$0x1] 0.0
        %1288 = vst [vmem:[#allocation2 + $0x41] sm:$0x1] 0.0
        %1289 = vst [vmem:[#allocation2 + $0x59] sm:$0x1] 0.0
        %1290 = vst [vmem:[#allocation2 + $0x71] sm:$0x1] 0.0
        %1291 = vst [vmem:[#allocation2 + $0x89] sm:$0x1] 0.0
        %1292 = vst [vmem:[#allocation2 + $0xa1] sm:$0x1] 0.0
        %1293 = vst [vmem:[#allocation2 + $0xb9] sm:$0x1] 0.0
        %1294 = vst [vmem:[#allocation2 + $0xd1] sm:$0x1] 0.0
        %1295 = vst [vmem:[#allocation2 + $0xe9] sm:$0x1] 0.0
        %1296 = vst [vmem:[#allocation2 + $0x1] sm:$0xff] %v1256
        %1297 = vst [vmem:[#allocation2 + $0x9] sm:$0xff] %v1257
        %1298 = vst [vmem:[#allocation2 + $0x19] sm:$0xff] %v1258
        %1299 = vst [vmem:[#allocation2 + $0x21] sm:$0xff] %v1259
        %1300 = vst [vmem:[#allocation2 + $0x31] sm:$0xff] %v1260
        %1301 = vst [vmem:[#allocation2 + $0x39] sm:$0xff] %v1261
        %1302 = vst [vmem:[#allocation2 + $0x49] sm:$0xff] %v1262
        %1303 = vst [vmem:[#allocation2 + $0x51] sm:$0xff] %v1263
        %1304 = vst [vmem:[#allocation2 + $0x61] sm:$0xff] %v1264
        %1305 = vst [vmem:[#allocation2 + $0x69] sm:$0xff] %v1265
        %1306 = vst [vmem:[#allocation2 + $0x79] sm:$0xff] %v1266
        %1307 = vst [vmem:[#allocation2 + $0x81] sm:$0xff] %v1267
        %1308 = vst [vmem:[#allocation2 + $0x91] sm:$0xff] %v1268
        %1309 = vst [vmem:[#allocation2 + $0x99] sm:$0xff] %v1269
        %1310 = vst [vmem:[#allocation2 + $0xa9] sm:$0xff] %v1270
        %1311 = vst [vmem:[#allocation2 + $0xb1] sm:$0xff] %v1271
        %1312 = vst [vmem:[#allocation2 + $0xc1] sm:$0xff] %v1272
        %1313 = vst [vmem:[#allocation2 + $0xc9] sm:$0xff] %v1273
        %1314 = vst [vmem:[#allocation2 + $0xd9] sm:$0xff] %v1274
        %1315 = vst [vmem:[#allocation2 + $0xe1] sm:$0xff] %v1275
        %p1316 = scmp.eq.s32.totalorder %s24, 0
        // Predicated region
        $region41: #{tpu_custom_call.1} parent=35 // pred_check
          %p1317 = pneg %p1316
        $region42: #{tpu_custom_call.1} parent=35 // pred_check_branch
          %1319 = sbr.rel (%p1317) target = $region44
        $region43: #{tpu_custom_call.1} parent=35 // pred_region
          %1320 = vst [vmem:[#allocation2] sm:$0xff] 0.0
          %1321 = vst [vmem:[#allocation2 + $0x8] sm:$0xff] 0.0
          %1322 = vst [vmem:[#allocation2 + $0x10] sm:$0x3] 0.0
        $region44: #{tpu_custom_call.1} parent=35 // pred_fallthru
          _
        %p1323 = scmp.eq.s32.totalorder %s24, 1
        // Predicated region
        $region45: #{tpu_custom_call.1} parent=35 // pred_check
          %p1324 = pneg %p1323
        $region46: #{tpu_custom_call.1} parent=35 // pred_check_branch
          %1326 = sbr.rel (%p1324) target = $region48
        $region47: #{tpu_custom_call.1} parent=35 // pred_region
          %s1327 = scalar_lea.vmem [#allocation2], 216
          %1328 = vst [vmem:[%s1327] sm:$0xff] 0.0
          %1329 = vst [vmem:[%s1327 + $0x8] sm:$0xff] 0.0
          %1330 = vst [vmem:[%s1327 + $0x10] sm:$0x3] 0.0
        $region48: #{tpu_custom_call.1} parent=35 // pred_fallthru
          _
        %v1331 = vld [vmem:[#allocation2] sm:$0xff]
        %v1332 = vld [vmem:[#allocation2 + $0x8] sm:$0xff]
        %v1333 = vld [vmem:[#allocation2 + $0x18] sm:$0xff]
        %v1334 = vld [vmem:[#allocation2 + $0x20] sm:$0xff]
        %v1335 = vld [vmem:[#allocation2 + $0x30] sm:$0xff]
        %v1336 = vld [vmem:[#allocation2 + $0x38] sm:$0xff]
        %v1337 = vld [vmem:[#allocation2 + $0x48] sm:$0xff]
        %v1338 = vld [vmem:[#allocation2 + $0x50] sm:$0xff]
        %v1339 = vld [vmem:[#allocation2 + $0x60] sm:$0xff]
        %v1340 = vld [vmem:[#allocation2 + $0x68] sm:$0xff]
        %v1341 = vld [vmem:[#allocation2 + $0x78] sm:$0xff]
        %v1342 = vld [vmem:[#allocation2 + $0x80] sm:$0xff]
        %v1343 = vld [vmem:[#allocation2 + $0x90] sm:$0xff]
        %v1344 = vld [vmem:[#allocation2 + $0x98] sm:$0xff]
        %v1345 = vld [vmem:[#allocation2 + $0xa8] sm:$0xff]
        %v1346 = vld [vmem:[#allocation2 + $0xb0] sm:$0xff]
        %v1347 = vld [vmem:[#allocation2 + $0x1] sm:$0xff]
        %v1348 = vld [vmem:[#allocation2 + $0x9] sm:$0xff]
        %v1349 = vld [vmem:[#allocation2 + $0x19] sm:$0xff]
        %v1350 = vld [vmem:[#allocation2 + $0x21] sm:$0xff]
        %v1351 = vld [vmem:[#allocation2 + $0x31] sm:$0xff]
        %v1352 = vld [vmem:[#allocation2 + $0x39] sm:$0xff]
        %v1353 = vld [vmem:[#allocation2 + $0x49] sm:$0xff]
        %v1354 = vld [vmem:[#allocation2 + $0x51] sm:$0xff]
        %v1355 = vld [vmem:[#allocation2 + $0x61] sm:$0xff]
        %v1356 = vld [vmem:[#allocation2 + $0x69] sm:$0xff]
        %v1357 = vld [vmem:[#allocation2 + $0x79] sm:$0xff]
        %v1358 = vld [vmem:[#allocation2 + $0x81] sm:$0xff]
        %v1359 = vld [vmem:[#allocation2 + $0x91] sm:$0xff]
        %v1360 = vld [vmem:[#allocation2 + $0x99] sm:$0xff]
        %v1361 = vld [vmem:[#allocation2 + $0xa9] sm:$0xff]
        %v1362 = vld [vmem:[#allocation2 + $0xb1] sm:$0xff]
        %v1363 = vld [vmem:[#allocation2 + $0x2] sm:$0xff]
        %v1364 = vld [vmem:[#allocation2 + $0xa] sm:$0xff]
        %v1365 = vld [vmem:[#allocation2 + $0x1a] sm:$0xff]
        %v1366 = vld [vmem:[#allocation2 + $0x22] sm:$0xff]
        %v1367 = vld [vmem:[#allocation2 + $0x32] sm:$0xff]
        %v1368 = vld [vmem:[#allocation2 + $0x3a] sm:$0xff]
        %v1369 = vld [vmem:[#allocation2 + $0x4a] sm:$0xff]
        %v1370 = vld [vmem:[#allocation2 + $0x52] sm:$0xff]
        %v1371 = vld [vmem:[#allocation2 + $0x62] sm:$0xff]
        %v1372 = vld [vmem:[#allocation2 + $0x6a] sm:$0xff]
        %v1373 = vld [vmem:[#allocation2 + $0x7a] sm:$0xff]
        %v1374 = vld [vmem:[#allocation2 + $0x82] sm:$0xff]
        %v1375 = vld [vmem:[#allocation2 + $0x92] sm:$0xff]
        %v1376 = vld [vmem:[#allocation2 + $0x9a] sm:$0xff]
        %v1377 = vld [vmem:[#allocation2 + $0xaa] sm:$0xff]
        %v1378 = vld [vmem:[#allocation2 + $0xb2] sm:$0xff]
        %s1379 = scalar_lea.vmem [#allocation2], 24
        %v1380 = vld [vmem:[%s1379] sm:$0xff]
        %v1381 = vld [vmem:[%s1379 + $0x8] sm:$0xff]
        %v1382 = vld [vmem:[%s1379 + $0x18] sm:$0xff]
        %v1383 = vld [vmem:[%s1379 + $0x20] sm:$0xff]
        %v1384 = vld [vmem:[%s1379 + $0x30] sm:$0xff]
        %v1385 = vld [vmem:[%s1379 + $0x38] sm:$0xff]
        %v1386 = vld [vmem:[%s1379 + $0x48] sm:$0xff]
        %v1387 = vld [vmem:[%s1379 + $0x50] sm:$0xff]
        %v1388 = vld [vmem:[%s1379 + $0x60] sm:$0xff]
        %v1389 = vld [vmem:[%s1379 + $0x68] sm:$0xff]
        %v1390 = vld [vmem:[%s1379 + $0x78] sm:$0xff]
        %v1391 = vld [vmem:[%s1379 + $0x80] sm:$0xff]
        %v1392 = vld [vmem:[%s1379 + $0x90] sm:$0xff]
        %v1393 = vld [vmem:[%s1379 + $0x98] sm:$0xff]
        %v1394 = vld [vmem:[%s1379 + $0xa8] sm:$0xff]
        %v1395 = vld [vmem:[%s1379 + $0xb0] sm:$0xff]
        %v1396 = vld [vmem:[%s1379 + $0x1] sm:$0xff]
        %v1397 = vld [vmem:[%s1379 + $0x9] sm:$0xff]
        %v1398 = vld [vmem:[%s1379 + $0x19] sm:$0xff]
        %v1399 = vld [vmem:[%s1379 + $0x21] sm:$0xff]
        %v1400 = vld [vmem:[%s1379 + $0x31] sm:$0xff]
        %v1401 = vld [vmem:[%s1379 + $0x39] sm:$0xff]
        %v1402 = vld [vmem:[%s1379 + $0x49] sm:$0xff]
        %v1403 = vld [vmem:[%s1379 + $0x51] sm:$0xff]
        %v1404 = vld [vmem:[%s1379 + $0x61] sm:$0xff]
        %v1405 = vld [vmem:[%s1379 + $0x69] sm:$0xff]
        %v1406 = vld [vmem:[%s1379 + $0x79] sm:$0xff]
        %v1407 = vld [vmem:[%s1379 + $0x81] sm:$0xff]
        %v1408 = vld [vmem:[%s1379 + $0x91] sm:$0xff]
        %v1409 = vld [vmem:[%s1379 + $0x99] sm:$0xff]
        %v1410 = vld [vmem:[%s1379 + $0xa9] sm:$0xff]
        %v1411 = vld [vmem:[%s1379 + $0xb1] sm:$0xff]
        %v1412 = vld [vmem:[%s1379 + $0x2] sm:$0xff]
        %v1413 = vld [vmem:[%s1379 + $0xa] sm:$0xff]
        %v1414 = vld [vmem:[%s1379 + $0x1a] sm:$0xff]
        %v1415 = vld [vmem:[%s1379 + $0x22] sm:$0xff]
        %v1416 = vld [vmem:[%s1379 + $0x32] sm:$0xff]
        %v1417 = vld [vmem:[%s1379 + $0x3a] sm:$0xff]
        %v1418 = vld [vmem:[%s1379 + $0x4a] sm:$0xff]
        %v1419 = vld [vmem:[%s1379 + $0x52] sm:$0xff]
        %v1420 = vld [vmem:[%s1379 + $0x62] sm:$0xff]
        %v1421 = vld [vmem:[%s1379 + $0x6a] sm:$0xff]
        %v1422 = vld [vmem:[%s1379 + $0x7a] sm:$0xff]
        %v1423 = vld [vmem:[%s1379 + $0x82] sm:$0xff]
        %v1424 = vld [vmem:[%s1379 + $0x92] sm:$0xff]
        %v1425 = vld [vmem:[%s1379 + $0x9a] sm:$0xff]
        %v1426 = vld [vmem:[%s1379 + $0xaa] sm:$0xff]
        %v1427 = vld [vmem:[%s1379 + $0xb2] sm:$0xff]
        %s1428 = scalar_lea.vmem [#allocation2], 48
        %v1429 = vld [vmem:[%s1428] sm:$0xff]
        %v1430 = vld [vmem:[%s1428 + $0x8] sm:$0xff]
        %v1431 = vld [vmem:[%s1428 + $0x18] sm:$0xff]
        %v1432 = vld [vmem:[%s1428 + $0x20] sm:$0xff]
        %v1433 = vld [vmem:[%s1428 + $0x30] sm:$0xff]
        %v1434 = vld [vmem:[%s1428 + $0x38] sm:$0xff]
        %v1435 = vld [vmem:[%s1428 + $0x48] sm:$0xff]
        %v1436 = vld [vmem:[%s1428 + $0x50] sm:$0xff]
        %v1437 = vld [vmem:[%s1428 + $0x60] sm:$0xff]
        %v1438 = vld [vmem:[%s1428 + $0x68] sm:$0xff]
        %v1439 = vld [vmem:[%s1428 + $0x78] sm:$0xff]
        %v1440 = vld [vmem:[%s1428 + $0x80] sm:$0xff]
        %v1441 = vld [vmem:[%s1428 + $0x90] sm:$0xff]
        %v1442 = vld [vmem:[%s1428 + $0x98] sm:$0xff]
        %v1443 = vld [vmem:[%s1428 + $0xa8] sm:$0xff]
        %v1444 = vld [vmem:[%s1428 + $0xb0] sm:$0xff]
        %v1445 = vld [vmem:[%s1428 + $0x1] sm:$0xff]
        %v1446 = vld [vmem:[%s1428 + $0x9] sm:$0xff]
        %v1447 = vld [vmem:[%s1428 + $0x19] sm:$0xff]
        %v1448 = vld [vmem:[%s1428 + $0x21] sm:$0xff]
        %v1449 = vld [vmem:[%s1428 + $0x31] sm:$0xff]
        %v1450 = vld [vmem:[%s1428 + $0x39] sm:$0xff]
        %v1451 = vld [vmem:[%s1428 + $0x49] sm:$0xff]
        %v1452 = vld [vmem:[%s1428 + $0x51] sm:$0xff]
        %v1453 = vld [vmem:[%s1428 + $0x61] sm:$0xff]
        %v1454 = vld [vmem:[%s1428 + $0x69] sm:$0xff]
        %v1455 = vld [vmem:[%s1428 + $0x79] sm:$0xff]
        %v1456 = vld [vmem:[%s1428 + $0x81] sm:$0xff]
        %v1457 = vld [vmem:[%s1428 + $0x91] sm:$0xff]
        %v1458 = vld [vmem:[%s1428 + $0x99] sm:$0xff]
        %v1459 = vld [vmem:[%s1428 + $0xa9] sm:$0xff]
        %v1460 = vld [vmem:[%s1428 + $0xb1] sm:$0xff]
        %v1461 = vld [vmem:[%s1428 + $0x2] sm:$0xff]
        %v1462 = vld [vmem:[%s1428 + $0xa] sm:$0xff]
        %v1463 = vld [vmem:[%s1428 + $0x1a] sm:$0xff]
        %v1464 = vld [vmem:[%s1428 + $0x22] sm:$0xff]
        %v1465 = vld [vmem:[%s1428 + $0x32] sm:$0xff]
        %v1466 = vld [vmem:[%s1428 + $0x3a] sm:$0xff]
        %v1467 = vld [vmem:[%s1428 + $0x4a] sm:$0xff]
        %v1468 = vld [vmem:[%s1428 + $0x52] sm:$0xff]
        %v1469 = vld [vmem:[%s1428 + $0x62] sm:$0xff]
        %v1470 = vld [vmem:[%s1428 + $0x6a] sm:$0xff]
        %v1471 = vld [vmem:[%s1428 + $0x7a] sm:$0xff]
        %v1472 = vld [vmem:[%s1428 + $0x82] sm:$0xff]
        %v1473 = vld [vmem:[%s1428 + $0x92] sm:$0xff]
        %v1474 = vld [vmem:[%s1428 + $0x9a] sm:$0xff]
        %v1475 = vld [vmem:[%s1428 + $0xaa] sm:$0xff]
        %v1476 = vld [vmem:[%s1428 + $0xb2] sm:$0xff]
        %v1477 = vld [vmem:[#allocation3] sm:$0xff]
        %v1478 = vld [vmem:[#allocation3 + $0x8] sm:$0xff]
        %v1479 = vld [vmem:[#allocation3 + $0x10] sm:$0xff]
        %v1480 = vld [vmem:[#allocation3 + $0x18] sm:$0xff]
        %v1481 = vld [vmem:[#allocation3 + $0x20] sm:$0xff]
        %v1482 = vld [vmem:[#allocation3 + $0x28] sm:$0xff]
        %v1483 = vld [vmem:[#allocation3 + $0x30] sm:$0xff]
        %v1484 = vld [vmem:[#allocation3 + $0x38] sm:$0xff]
        %v1485 = vld [vmem:[#allocation3 + $0x40] sm:$0xff]
        %v1486 = vld [vmem:[#allocation3 + $0x48] sm:$0xff]
        %v1487 = vld [vmem:[#allocation3 + $0x50] sm:$0xff]
        %v1488 = vld [vmem:[#allocation3 + $0x58] sm:$0xff]
        %v1489 = vld [vmem:[#allocation3 + $0x60] sm:$0xff]
        %v1490 = vld [vmem:[#allocation3 + $0x68] sm:$0xff]
        %v1491 = vld [vmem:[#allocation3 + $0x70] sm:$0xff]
        %v1492 = vld [vmem:[#allocation3 + $0x78] sm:$0xff]
        %v1493 = vld [vmem:[#allocation3 + $0x80] sm:$0xff]
        %v1494 = vld [vmem:[#allocation3 + $0x88] sm:$0xff]
        %v1495 = vld [vmem:[#allocation3 + $0x90] sm:$0xff]
        %v1496 = vld [vmem:[#allocation3 + $0x98] sm:$0xff]
        %v1497 = vld [vmem:[#allocation3 + $0xa0] sm:$0xff]
        %v1498 = vld [vmem:[#allocation3 + $0xa8] sm:$0xff]
        %v1499 = vld [vmem:[#allocation3 + $0xb0] sm:$0xff]
        %v1500 = vld [vmem:[#allocation3 + $0xb8] sm:$0xff]
        %v1501 = vld [vmem:[#allocation3 + $0xc0] sm:$0xff]
        %v1502 = vld [vmem:[#allocation3 + $0xc8] sm:$0xff]
        %v1503 = vld [vmem:[#allocation3 + $0xd0] sm:$0xff]
        %v1504 = vld [vmem:[#allocation3 + $0xd8] sm:$0xff]
        %v1505 = vld [vmem:[#allocation3 + $0xe0] sm:$0xff]
        %v1506 = vld [vmem:[#allocation3 + $0xe8] sm:$0xff]
        %v1507 = vld [vmem:[#allocation3 + $0xf0] sm:$0xff]
        %v1508 = vld [vmem:[#allocation3 + $0xf8] sm:$0xff]
        %v1509 = vld [vmem:[#allocation3 + $0x100] sm:$0xff]
        %v1510 = vld [vmem:[#allocation3 + $0x108] sm:$0xff]
        %v1511 = vld [vmem:[#allocation3 + $0x110] sm:$0xff]
        %v1512 = vld [vmem:[#allocation3 + $0x118] sm:$0xff]
        %v1513 = vld [vmem:[#allocation3 + $0x120] sm:$0xff]
        %v1514 = vld [vmem:[#allocation3 + $0x128] sm:$0xff]
        %v1515 = vld [vmem:[#allocation3 + $0x130] sm:$0xff]
        %v1516 = vld [vmem:[#allocation3 + $0x138] sm:$0xff]
        %v1517 = vld [vmem:[#allocation3 + $0x140] sm:$0xff]
        %v1518 = vld [vmem:[#allocation3 + $0x148] sm:$0xff]
        %v1519 = vld [vmem:[#allocation3 + $0x150] sm:$0xff]
        %v1520 = vld [vmem:[#allocation3 + $0x158] sm:$0xff]
        %v1521 = vld [vmem:[#allocation3 + $0x160] sm:$0xff]
        %v1522 = vld [vmem:[#allocation3 + $0x168] sm:$0xff]
        %v1523 = vld [vmem:[#allocation3 + $0x170] sm:$0xff]
        %v1524 = vld [vmem:[#allocation3 + $0x178] sm:$0xff]
        %v1525 = vld [vmem:[#allocation3 + $0x180] sm:$0xff]
        %v1526 = vld [vmem:[#allocation3 + $0x188] sm:$0xff]
        %v1527 = vld [vmem:[#allocation3 + $0x190] sm:$0xff]
        %v1528 = vld [vmem:[#allocation3 + $0x198] sm:$0xff]
        %v1529 = vld [vmem:[#allocation3 + $0x1a0] sm:$0xff]
        %v1530 = vld [vmem:[#allocation3 + $0x1a8] sm:$0xff]
        %v1531 = vld [vmem:[#allocation3 + $0x1b0] sm:$0xff]
        %v1532 = vld [vmem:[#allocation3 + $0x1b8] sm:$0xff]
        %v1533 = vld [vmem:[#allocation3 + $0x1c0] sm:$0xff]
        %v1534 = vld [vmem:[#allocation3 + $0x1c8] sm:$0xff]
        %v1535 = vld [vmem:[#allocation3 + $0x1d0] sm:$0xff]
        %v1536 = vld [vmem:[#allocation3 + $0x1d8] sm:$0xff]
        %v1537 = vld [vmem:[#allocation3 + $0x1e0] sm:$0xff]
        %v1538 = vld [vmem:[#allocation3 + $0x1e8] sm:$0xff]
        %v1539 = vld [vmem:[#allocation3 + $0x1f0] sm:$0xff]
        %v1540 = vld [vmem:[#allocation3 + $0x1f8] sm:$0xff]
        %v1541 = vld [vmem:[#allocation3 + $0x200] sm:$0xff]
        %v1542 = vld [vmem:[#allocation3 + $0x208] sm:$0xff]
        %v1543 = vld [vmem:[#allocation3 + $0x210] sm:$0xff]
        %v1544 = vld [vmem:[#allocation3 + $0x218] sm:$0xff]
        %v1545 = vld [vmem:[#allocation3 + $0x220] sm:$0xff]
        %v1546 = vld [vmem:[#allocation3 + $0x228] sm:$0xff]
        %v1547 = vld [vmem:[#allocation3 + $0x230] sm:$0xff]
        %v1548 = vld [vmem:[#allocation3 + $0x238] sm:$0xff]
        %v1549 = vld [vmem:[#allocation3 + $0x240] sm:$0xff]
        %v1550 = vld [vmem:[#allocation3 + $0x248] sm:$0xff]
        %v1551 = vld [vmem:[#allocation3 + $0x250] sm:$0xff]
        %v1552 = vld [vmem:[#allocation3 + $0x258] sm:$0xff]
        %v1553 = vld [vmem:[#allocation3 + $0x260] sm:$0xff]
        %v1554 = vld [vmem:[#allocation3 + $0x268] sm:$0xff]
        %v1555 = vld [vmem:[#allocation3 + $0x270] sm:$0xff]
        %v1556 = vld [vmem:[#allocation3 + $0x278] sm:$0xff]
        %v1557 = vld [vmem:[#allocation3 + $0x280] sm:$0xff]
        %v1558 = vld [vmem:[#allocation3 + $0x288] sm:$0xff]
        %v1559 = vld [vmem:[#allocation3 + $0x290] sm:$0xff]
        %v1560 = vld [vmem:[#allocation3 + $0x298] sm:$0xff]
        %v1561 = vld [vmem:[#allocation3 + $0x2a0] sm:$0xff]
        %v1562 = vld [vmem:[#allocation3 + $0x2a8] sm:$0xff]
        %v1563 = vld [vmem:[#allocation3 + $0x2b0] sm:$0xff]
        %v1564 = vld [vmem:[#allocation3 + $0x2b8] sm:$0xff]
        %v1565 = vld [vmem:[#allocation3 + $0x2c0] sm:$0xff]
        %v1566 = vld [vmem:[#allocation3 + $0x2c8] sm:$0xff]
        %v1567 = vld [vmem:[#allocation3 + $0x2d0] sm:$0xff]
        %v1568 = vld [vmem:[#allocation3 + $0x2d8] sm:$0xff]
        %v1569 = vld [vmem:[#allocation3 + $0x2e0] sm:$0xff]
        %v1570 = vld [vmem:[#allocation3 + $0x2e8] sm:$0xff]
        %v1571 = vld [vmem:[#allocation3 + $0x2f0] sm:$0xff]
        %v1572 = vld [vmem:[#allocation3 + $0x2f8] sm:$0xff]
        %v1573 = vld [vmem:[#allocation3 + $0x300] sm:$0xff]
        %v1574 = vld [vmem:[#allocation3 + $0x308] sm:$0xff]
        %v1575 = vld [vmem:[#allocation3 + $0x310] sm:$0xff]
        %v1576 = vld [vmem:[#allocation3 + $0x318] sm:$0xff]
        %v1577 = vld [vmem:[#allocation3 + $0x320] sm:$0xff]
        %v1578 = vld [vmem:[#allocation3 + $0x328] sm:$0xff]
        %v1579 = vld [vmem:[#allocation3 + $0x330] sm:$0xff]
        %v1580 = vld [vmem:[#allocation3 + $0x338] sm:$0xff]
        %v1581 = vld [vmem:[#allocation3 + $0x340] sm:$0xff]
        %v1582 = vld [vmem:[#allocation3 + $0x348] sm:$0xff]
        %v1583 = vld [vmem:[#allocation3 + $0x350] sm:$0xff]
        %v1584 = vld [vmem:[#allocation3 + $0x358] sm:$0xff]
        %v1585 = vld [vmem:[#allocation3 + $0x360] sm:$0xff]
        %v1586 = vld [vmem:[#allocation3 + $0x368] sm:$0xff]
        %v1587 = vld [vmem:[#allocation3 + $0x370] sm:$0xff]
        %v1588 = vld [vmem:[#allocation3 + $0x378] sm:$0xff]
        %v1589 = vld [vmem:[#allocation3 + $0x380] sm:$0xff]
        %v1590 = vld [vmem:[#allocation3 + $0x388] sm:$0xff]
        %v1591 = vld [vmem:[#allocation3 + $0x390] sm:$0xff]
        %v1592 = vld [vmem:[#allocation3 + $0x398] sm:$0xff]
        %v1593 = vld [vmem:[#allocation3 + $0x3a0] sm:$0xff]
        %v1594 = vld [vmem:[#allocation3 + $0x3a8] sm:$0xff]
        %v1595 = vld [vmem:[#allocation3 + $0x3b0] sm:$0xff]
        %v1596 = vld [vmem:[#allocation3 + $0x3b8] sm:$0xff]
        %v1597 = vld [vmem:[#allocation3 + $0x3c0] sm:$0xff]
        %v1598 = vld [vmem:[#allocation3 + $0x3c8] sm:$0xff]
        %v1599 = vld [vmem:[#allocation3 + $0x3d0] sm:$0xff]
        %v1600 = vld [vmem:[#allocation3 + $0x3d8] sm:$0xff]
        %v1601 = vld [vmem:[#allocation3 + $0x3e0] sm:$0xff]
        %v1602 = vld [vmem:[#allocation3 + $0x3e8] sm:$0xff]
        %v1603 = vld [vmem:[#allocation3 + $0x3f0] sm:$0xff]
        %v1604 = vld [vmem:[#allocation3 + $0x3f8] sm:$0xff]
        %v1605 = vld [vmem:[#allocation3 + $0x400] sm:$0xff]
        %v1606 = vld [vmem:[#allocation3 + $0x408] sm:$0xff]
        %v1607 = vld [vmem:[#allocation3 + $0x410] sm:$0xff]
        %v1608 = vld [vmem:[#allocation3 + $0x418] sm:$0xff]
        %v1609 = vld [vmem:[#allocation3 + $0x420] sm:$0xff]
        %v1610 = vld [vmem:[#allocation3 + $0x428] sm:$0xff]
        %v1611 = vld [vmem:[#allocation3 + $0x430] sm:$0xff]
        %v1612 = vld [vmem:[#allocation3 + $0x438] sm:$0xff]
        %v1613 = vld [vmem:[#allocation3 + $0x440] sm:$0xff]
        %v1614 = vld [vmem:[#allocation3 + $0x448] sm:$0xff]
        %v1615 = vld [vmem:[#allocation3 + $0x450] sm:$0xff]
        %v1616 = vld [vmem:[#allocation3 + $0x458] sm:$0xff]
        %v1617 = vld [vmem:[#allocation3 + $0x460] sm:$0xff]
        %v1618 = vld [vmem:[#allocation3 + $0x468] sm:$0xff]
        %v1619 = vld [vmem:[#allocation3 + $0x470] sm:$0xff]
        %v1620 = vld [vmem:[#allocation3 + $0x478] sm:$0xff]
        %v1621 = vld [vmem:[%s3 + $0x1] sm:$0x1]
        %v1622 = vperm.slane %v1621, 0
        %1623 = vmatpush.msra.mxu0 %v1492
        %1624 = vmatpush.msra.mxu0 %v1491
        %1625 = vmatpush.msra.mxu0 %v1490
        %1626 = vmatpush.msra.mxu0 %v1489
        %1627 = vmatpush.msra.mxu0 %v1488
        %1628 = vmatpush.msra.mxu0 %v1487
        %1629 = vmatpush.msra.mxu0 %v1486
        %1630 = vmatpush.msra.mxu0 %v1485
        %1631 = vmatpush.msra.mxu0 %v1484
        %1632 = vmatpush.msra.mxu0 %v1483
        %1633 = vmatpush.msra.mxu0 %v1482
        %1634 = vmatpush.msra.mxu0 %v1481
        %1635 = vmatpush.msra.mxu0 %v1480
        %1636 = vmatpush.msra.mxu0 %v1479
        %1637 = vmatpush.msra.mxu0 %v1478
        %1638 = vmatpush.msra.mxu0 %v1477
        %1639 = vmatmul.f32.gmra.mxu0 %v1331
        %v1640 = vpop.f32.mrf.mxu0
        %v1641 = vadd.f32 %v1622, %v1640
        %1642 = vmatmul.f32.gmra.mxu0 %v1332
        %v1643 = vpop.f32.mrf.mxu0
        %v1644 = vadd.f32 %v1622, %v1643
        %1645 = vmatmul.f32.gmra.mxu0 %v1333
        %v1646 = vpop.f32.mrf.mxu0
        %v1647 = vadd.f32 %v1622, %v1646
        %1648 = vmatmul.f32.gmra.mxu0 %v1334
        %v1649 = vpop.f32.mrf.mxu0
        %v1650 = vadd.f32 %v1622, %v1649
        %1651 = vmatmul.f32.gmra.mxu0 %v1335
        %v1652 = vpop.f32.mrf.mxu0
        %v1653 = vadd.f32 %v1622, %v1652
        %1654 = vmatmul.f32.gmra.mxu0 %v1336
        %v1655 = vpop.f32.mrf.mxu0
        %v1656 = vadd.f32 %v1622, %v1655
        %1657 = vmatmul.f32.gmra.mxu0 %v1337
        %v1658 = vpop.f32.mrf.mxu0
        %v1659 = vadd.f32 %v1622, %v1658
        %1660 = vmatmul.f32.gmra.mxu0 %v1338
        %v1661 = vpop.f32.mrf.mxu0
        %v1662 = vadd.f32 %v1622, %v1661
        %1663 = vmatmul.f32.gmra.mxu0 %v1339
        %v1664 = vpop.f32.mrf.mxu0
        %v1665 = vadd.f32 %v1622, %v1664
        %1666 = vmatmul.f32.gmra.mxu0 %v1340
        %v1667 = vpop.f32.mrf.mxu0
        %v1668 = vadd.f32 %v1622, %v1667
        %1669 = vmatmul.f32.gmra.mxu0 %v1341
        %v1670 = vpop.f32.mrf.mxu0
        %v1671 = vadd.f32 %v1622, %v1670
        %1672 = vmatmul.f32.gmra.mxu0 %v1342
        %v1673 = vpop.f32.mrf.mxu0
        %v1674 = vadd.f32 %v1622, %v1673
        %1675 = vmatmul.f32.gmra.mxu0 %v1343
        %v1676 = vpop.f32.mrf.mxu0
        %v1677 = vadd.f32 %v1622, %v1676
        %1678 = vmatmul.f32.gmra.mxu0 %v1344
        %v1679 = vpop.f32.mrf.mxu0
        %v1680 = vadd.f32 %v1622, %v1679
        %1681 = vmatmul.f32.gmra.mxu0 %v1345
        %v1682 = vpop.f32.mrf.mxu0
        %v1683 = vadd.f32 %v1622, %v1682
        %1684 = vmatmul.f32.gmra.mxu0 %v1346
        %v1685 = vpop.f32.mrf.mxu0
        %v1686 = vadd.f32 %v1622, %v1685
        %1687 = vdwg.mxu0
        %1688 = vmatpush.msra.mxu0 %v1508
        %1689 = vmatpush.msra.mxu0 %v1507
        %1690 = vmatpush.msra.mxu0 %v1506
        %1691 = vmatpush.msra.mxu0 %v1505
        %1692 = vmatpush.msra.mxu0 %v1504
        %1693 = vmatpush.msra.mxu0 %v1503
        %1694 = vmatpush.msra.mxu0 %v1502
        %1695 = vmatpush.msra.mxu0 %v1501
        %1696 = vmatpush.msra.mxu0 %v1500
        %1697 = vmatpush.msra.mxu0 %v1499
        %1698 = vmatpush.msra.mxu0 %v1498
        %1699 = vmatpush.msra.mxu0 %v1497
        %1700 = vmatpush.msra.mxu0 %v1496
        %1701 = vmatpush.msra.mxu0 %v1495
        %1702 = vmatpush.msra.mxu0 %v1494
        %1703 = vmatpush.msra.mxu0 %v1493
        %1704 = vmatmul.f32.gmra.mxu0 %v1347
        %v1705 = vpop.f32.mrf.mxu0
        %v1706 = vadd.f32 %v1641, %v1705
        %1707 = vmatmul.f32.gmra.mxu0 %v1348
        %v1708 = vpop.f32.mrf.mxu0
        %v1709 = vadd.f32 %v1644, %v1708
        %1710 = vmatmul.f32.gmra.mxu0 %v1349
        %v1711 = vpop.f32.mrf.mxu0
        %v1712 = vadd.f32 %v1647, %v1711
        %1713 = vmatmul.f32.gmra.mxu0 %v1350
        %v1714 = vpop.f32.mrf.mxu0
        %v1715 = vadd.f32 %v1650, %v1714
        %1716 = vmatmul.f32.gmra.mxu0 %v1351
        %v1717 = vpop.f32.mrf.mxu0
        %v1718 = vadd.f32 %v1653, %v1717
        %1719 = vmatmul.f32.gmra.mxu0 %v1352
        %v1720 = vpop.f32.mrf.mxu0
        %v1721 = vadd.f32 %v1656, %v1720
        %1722 = vmatmul.f32.gmra.mxu0 %v1353
        %v1723 = vpop.f32.mrf.mxu0
        %v1724 = vadd.f32 %v1659, %v1723
        %1725 = vmatmul.f32.gmra.mxu0 %v1354
        %v1726 = vpop.f32.mrf.mxu0
        %v1727 = vadd.f32 %v1662, %v1726
        %1728 = vmatmul.f32.gmra.mxu0 %v1355
        %v1729 = vpop.f32.mrf.mxu0
        %v1730 = vadd.f32 %v1665, %v1729
        %1731 = vmatmul.f32.gmra.mxu0 %v1356
        %v1732 = vpop.f32.mrf.mxu0
        %v1733 = vadd.f32 %v1668, %v1732
        %1734 = vmatmul.f32.gmra.mxu0 %v1357
        %v1735 = vpop.f32.mrf.mxu0
        %v1736 = vadd.f32 %v1671, %v1735
        %1737 = vmatmul.f32.gmra.mxu0 %v1358
        %v1738 = vpop.f32.mrf.mxu0
        %v1739 = vadd.f32 %v1674, %v1738
        %1740 = vmatmul.f32.gmra.mxu0 %v1359
        %v1741 = vpop.f32.mrf.mxu0
        %v1742 = vadd.f32 %v1677, %v1741
        %1743 = vmatmul.f32.gmra.mxu0 %v1360
        %v1744 = vpop.f32.mrf.mxu0
        %v1745 = vadd.f32 %v1680, %v1744
        %1746 = vmatmul.f32.gmra.mxu0 %v1361
        %v1747 = vpop.f32.mrf.mxu0
        %v1748 = vadd.f32 %v1683, %v1747
        %1749 = vmatmul.f32.gmra.mxu0 %v1362
        %v1750 = vpop.f32.mrf.mxu0
        %v1751 = vadd.f32 %v1686, %v1750
        %1752 = vdwg.mxu0
        %1753 = vmatpush.msra.mxu0 %v1524
        %1754 = vmatpush.msra.mxu0 %v1523
        %1755 = vmatpush.msra.mxu0 %v1522
        %1756 = vmatpush.msra.mxu0 %v1521
        %1757 = vmatpush.msra.mxu0 %v1520
        %1758 = vmatpush.msra.mxu0 %v1519
        %1759 = vmatpush.msra.mxu0 %v1518
        %1760 = vmatpush.msra.mxu0 %v1517
        %1761 = vmatpush.msra.mxu0 %v1516
        %1762 = vmatpush.msra.mxu0 %v1515
        %1763 = vmatpush.msra.mxu0 %v1514
        %1764 = vmatpush.msra.mxu0 %v1513
        %1765 = vmatpush.msra.mxu0 %v1512
        %1766 = vmatpush.msra.mxu0 %v1511
        %1767 = vmatpush.msra.mxu0 %v1510
        %1768 = vmatpush.msra.mxu0 %v1509
        %1769 = vmatmul.f32.gmra.mxu0 %v1363
        %v1770 = vpop.f32.mrf.mxu0
        %v1771 = vadd.f32 %v1706, %v1770
        %1772 = vmatmul.f32.gmra.mxu0 %v1364
        %v1773 = vpop.f32.mrf.mxu0
        %v1774 = vadd.f32 %v1709, %v1773
        %1775 = vmatmul.f32.gmra.mxu0 %v1365
        %v1776 = vpop.f32.mrf.mxu0
        %v1777 = vadd.f32 %v1712, %v1776
        %1778 = vmatmul.f32.gmra.mxu0 %v1366
        %v1779 = vpop.f32.mrf.mxu0
        %v1780 = vadd.f32 %v1715, %v1779
        %1781 = vmatmul.f32.gmra.mxu0 %v1367
        %v1782 = vpop.f32.mrf.mxu0
        %v1783 = vadd.f32 %v1718, %v1782
        %1784 = vmatmul.f32.gmra.mxu0 %v1368
        %v1785 = vpop.f32.mrf.mxu0
        %v1786 = vadd.f32 %v1721, %v1785
        %1787 = vmatmul.f32.gmra.mxu0 %v1369
        %v1788 = vpop.f32.mrf.mxu0
        %v1789 = vadd.f32 %v1724, %v1788
        %1790 = vmatmul.f32.gmra.mxu0 %v1370
        %v1791 = vpop.f32.mrf.mxu0
        %v1792 = vadd.f32 %v1727, %v1791
        %1793 = vmatmul.f32.gmra.mxu0 %v1371
        %v1794 = vpop.f32.mrf.mxu0
        %v1795 = vadd.f32 %v1730, %v1794
        %1796 = vmatmul.f32.gmra.mxu0 %v1372
        %v1797 = vpop.f32.mrf.mxu0
        %v1798 = vadd.f32 %v1733, %v1797
        %1799 = vmatmul.f32.gmra.mxu0 %v1373
        %v1800 = vpop.f32.mrf.mxu0
        %v1801 = vadd.f32 %v1736, %v1800
        %1802 = vmatmul.f32.gmra.mxu0 %v1374
        %v1803 = vpop.f32.mrf.mxu0
        %v1804 = vadd.f32 %v1739, %v1803
        %1805 = vmatmul.f32.gmra.mxu0 %v1375
        %v1806 = vpop.f32.mrf.mxu0
        %v1807 = vadd.f32 %v1742, %v1806
        %1808 = vmatmul.f32.gmra.mxu0 %v1376
        %v1809 = vpop.f32.mrf.mxu0
        %v1810 = vadd.f32 %v1745, %v1809
        %1811 = vmatmul.f32.gmra.mxu0 %v1377
        %v1812 = vpop.f32.mrf.mxu0
        %v1813 = vadd.f32 %v1748, %v1812
        %1814 = vmatmul.f32.gmra.mxu0 %v1378
        %v1815 = vpop.f32.mrf.mxu0
        %v1816 = vadd.f32 %v1751, %v1815
        %1817 = vdwg.mxu0
        %1818 = vmatpush.msra.mxu0 %v1540
        %1819 = vmatpush.msra.mxu0 %v1539
        %1820 = vmatpush.msra.mxu0 %v1538
        %1821 = vmatpush.msra.mxu0 %v1537
        %1822 = vmatpush.msra.mxu0 %v1536
        %1823 = vmatpush.msra.mxu0 %v1535
        %1824 = vmatpush.msra.mxu0 %v1534
        %1825 = vmatpush.msra.mxu0 %v1533
        %1826 = vmatpush.msra.mxu0 %v1532
        %1827 = vmatpush.msra.mxu0 %v1531
        %1828 = vmatpush.msra.mxu0 %v1530
        %1829 = vmatpush.msra.mxu0 %v1529
        %1830 = vmatpush.msra.mxu0 %v1528
        %1831 = vmatpush.msra.mxu0 %v1527
        %1832 = vmatpush.msra.mxu0 %v1526
        %1833 = vmatpush.msra.mxu0 %v1525
        %1834 = vmatmul.f32.gmra.mxu0 %v1380
        %v1835 = vpop.f32.mrf.mxu0
        %v1836 = vadd.f32 %v1771, %v1835
        %1837 = vmatmul.f32.gmra.mxu0 %v1381
        %v1838 = vpop.f32.mrf.mxu0
        %v1839 = vadd.f32 %v1774, %v1838
        %1840 = vmatmul.f32.gmra.mxu0 %v1382
        %v1841 = vpop.f32.mrf.mxu0
        %v1842 = vadd.f32 %v1777, %v1841
        %1843 = vmatmul.f32.gmra.mxu0 %v1383
        %v1844 = vpop.f32.mrf.mxu0
        %v1845 = vadd.f32 %v1780, %v1844
        %1846 = vmatmul.f32.gmra.mxu0 %v1384
        %v1847 = vpop.f32.mrf.mxu0
        %v1848 = vadd.f32 %v1783, %v1847
        %1849 = vmatmul.f32.gmra.mxu0 %v1385
        %v1850 = vpop.f32.mrf.mxu0
        %v1851 = vadd.f32 %v1786, %v1850
        %1852 = vmatmul.f32.gmra.mxu0 %v1386
        %v1853 = vpop.f32.mrf.mxu0
        %v1854 = vadd.f32 %v1789, %v1853
        %1855 = vmatmul.f32.gmra.mxu0 %v1387
        %v1856 = vpop.f32.mrf.mxu0
        %v1857 = vadd.f32 %v1792, %v1856
        %1858 = vmatmul.f32.gmra.mxu0 %v1388
        %v1859 = vpop.f32.mrf.mxu0
        %v1860 = vadd.f32 %v1795, %v1859
        %1861 = vmatmul.f32.gmra.mxu0 %v1389
        %v1862 = vpop.f32.mrf.mxu0
        %v1863 = vadd.f32 %v1798, %v1862
        %1864 = vmatmul.f32.gmra.mxu0 %v1390
        %v1865 = vpop.f32.mrf.mxu0
        %v1866 = vadd.f32 %v1801, %v1865
        %1867 = vmatmul.f32.gmra.mxu0 %v1391
        %v1868 = vpop.f32.mrf.mxu0
        %v1869 = vadd.f32 %v1804, %v1868
        %1870 = vmatmul.f32.gmra.mxu0 %v1392
        %v1871 = vpop.f32.mrf.mxu0
        %v1872 = vadd.f32 %v1807, %v1871
        %1873 = vmatmul.f32.gmra.mxu0 %v1393
        %v1874 = vpop.f32.mrf.mxu0
        %v1875 = vadd.f32 %v1810, %v1874
        %1876 = vmatmul.f32.gmra.mxu0 %v1394
        %v1877 = vpop.f32.mrf.mxu0
        %v1878 = vadd.f32 %v1813, %v1877
        %1879 = vmatmul.f32.gmra.mxu0 %v1395
        %v1880 = vpop.f32.mrf.mxu0
        %v1881 = vadd.f32 %v1816, %v1880
        %1882 = vdwg.mxu0
        %1883 = vmatpush.msra.mxu0 %v1556
        %1884 = vmatpush.msra.mxu0 %v1555
        %1885 = vmatpush.msra.mxu0 %v1554
        %1886 = vmatpush.msra.mxu0 %v1553
        %1887 = vmatpush.msra.mxu0 %v1552
        %1888 = vmatpush.msra.mxu0 %v1551
        %1889 = vmatpush.msra.mxu0 %v1550
        %1890 = vmatpush.msra.mxu0 %v1549
        %1891 = vmatpush.msra.mxu0 %v1548
        %1892 = vmatpush.msra.mxu0 %v1547
        %1893 = vmatpush.msra.mxu0 %v1546
        %1894 = vmatpush.msra.mxu0 %v1545
        %1895 = vmatpush.msra.mxu0 %v1544
        %1896 = vmatpush.msra.mxu0 %v1543
        %1897 = vmatpush.msra.mxu0 %v1542
        %1898 = vmatpush.msra.mxu0 %v1541
        %1899 = vmatmul.f32.gmra.mxu0 %v1396
        %v1900 = vpop.f32.mrf.mxu0
        %v1901 = vadd.f32 %v1836, %v1900
        %1902 = vmatmul.f32.gmra.mxu0 %v1397
        %v1903 = vpop.f32.mrf.mxu0
        %v1904 = vadd.f32 %v1839, %v1903
        %1905 = vmatmul.f32.gmra.mxu0 %v1398
        %v1906 = vpop.f32.mrf.mxu0
        %v1907 = vadd.f32 %v1842, %v1906
        %1908 = vmatmul.f32.gmra.mxu0 %v1399
        %v1909 = vpop.f32.mrf.mxu0
        %v1910 = vadd.f32 %v1845, %v1909
        %1911 = vmatmul.f32.gmra.mxu0 %v1400
        %v1912 = vpop.f32.mrf.mxu0
        %v1913 = vadd.f32 %v1848, %v1912
        %1914 = vmatmul.f32.gmra.mxu0 %v1401
        %v1915 = vpop.f32.mrf.mxu0
        %v1916 = vadd.f32 %v1851, %v1915
        %1917 = vmatmul.f32.gmra.mxu0 %v1402
        %v1918 = vpop.f32.mrf.mxu0
        %v1919 = vadd.f32 %v1854, %v1918
        %1920 = vmatmul.f32.gmra.mxu0 %v1403
        %v1921 = vpop.f32.mrf.mxu0
        %v1922 = vadd.f32 %v1857, %v1921
        %1923 = vmatmul.f32.gmra.mxu0 %v1404
        %v1924 = vpop.f32.mrf.mxu0
        %v1925 = vadd.f32 %v1860, %v1924
        %1926 = vmatmul.f32.gmra.mxu0 %v1405
        %v1927 = vpop.f32.mrf.mxu0
        %v1928 = vadd.f32 %v1863, %v1927
        %1929 = vmatmul.f32.gmra.mxu0 %v1406
        %v1930 = vpop.f32.mrf.mxu0
        %v1931 = vadd.f32 %v1866, %v1930
        %1932 = vmatmul.f32.gmra.mxu0 %v1407
        %v1933 = vpop.f32.mrf.mxu0
        %v1934 = vadd.f32 %v1869, %v1933
        %1935 = vmatmul.f32.gmra.mxu0 %v1408
        %v1936 = vpop.f32.mrf.mxu0
        %v1937 = vadd.f32 %v1872, %v1936
        %1938 = vmatmul.f32.gmra.mxu0 %v1409
        %v1939 = vpop.f32.mrf.mxu0
        %v1940 = vadd.f32 %v1875, %v1939
        %1941 = vmatmul.f32.gmra.mxu0 %v1410
        %v1942 = vpop.f32.mrf.mxu0
        %v1943 = vadd.f32 %v1878, %v1942
        %1944 = vmatmul.f32.gmra.mxu0 %v1411
        %v1945 = vpop.f32.mrf.mxu0
        %v1946 = vadd.f32 %v1881, %v1945
        %1947 = vdwg.mxu0
        %1948 = vmatpush.msra.mxu0 %v1572
        %1949 = vmatpush.msra.mxu0 %v1571
        %1950 = vmatpush.msra.mxu0 %v1570
        %1951 = vmatpush.msra.mxu0 %v1569
        %1952 = vmatpush.msra.mxu0 %v1568
        %1953 = vmatpush.msra.mxu0 %v1567
        %1954 = vmatpush.msra.mxu0 %v1566
        %1955 = vmatpush.msra.mxu0 %v1565
        %1956 = vmatpush.msra.mxu0 %v1564
        %1957 = vmatpush.msra.mxu0 %v1563
        %1958 = vmatpush.msra.mxu0 %v1562
        %1959 = vmatpush.msra.mxu0 %v1561
        %1960 = vmatpush.msra.mxu0 %v1560
        %1961 = vmatpush.msra.mxu0 %v1559
        %1962 = vmatpush.msra.mxu0 %v1558
        %1963 = vmatpush.msra.mxu0 %v1557
        %1964 = vmatmul.f32.gmra.mxu0 %v1412
        %v1965 = vpop.f32.mrf.mxu0
        %v1966 = vadd.f32 %v1901, %v1965
        %1967 = vmatmul.f32.gmra.mxu0 %v1413
        %v1968 = vpop.f32.mrf.mxu0
        %v1969 = vadd.f32 %v1904, %v1968
        %1970 = vmatmul.f32.gmra.mxu0 %v1414
        %v1971 = vpop.f32.mrf.mxu0
        %v1972 = vadd.f32 %v1907, %v1971
        %1973 = vmatmul.f32.gmra.mxu0 %v1415
        %v1974 = vpop.f32.mrf.mxu0
        %v1975 = vadd.f32 %v1910, %v1974
        %1976 = vmatmul.f32.gmra.mxu0 %v1416
        %v1977 = vpop.f32.mrf.mxu0
        %v1978 = vadd.f32 %v1913, %v1977
        %1979 = vmatmul.f32.gmra.mxu0 %v1417
        %v1980 = vpop.f32.mrf.mxu0
        %v1981 = vadd.f32 %v1916, %v1980
        %1982 = vmatmul.f32.gmra.mxu0 %v1418
        %v1983 = vpop.f32.mrf.mxu0
        %v1984 = vadd.f32 %v1919, %v1983
        %1985 = vmatmul.f32.gmra.mxu0 %v1419
        %v1986 = vpop.f32.mrf.mxu0
        %v1987 = vadd.f32 %v1922, %v1986
        %1988 = vmatmul.f32.gmra.mxu0 %v1420
        %v1989 = vpop.f32.mrf.mxu0
        %v1990 = vadd.f32 %v1925, %v1989
        %1991 = vmatmul.f32.gmra.mxu0 %v1421
        %v1992 = vpop.f32.mrf.mxu0
        %v1993 = vadd.f32 %v1928, %v1992
        %1994 = vmatmul.f32.gmra.mxu0 %v1422
        %v1995 = vpop.f32.mrf.mxu0
        %v1996 = vadd.f32 %v1931, %v1995
        %1997 = vmatmul.f32.gmra.mxu0 %v1423
        %v1998 = vpop.f32.mrf.mxu0
        %v1999 = vadd.f32 %v1934, %v1998
        %2000 = vmatmul.f32.gmra.mxu0 %v1424
        %v2001 = vpop.f32.mrf.mxu0
        %v2002 = vadd.f32 %v1937, %v2001
        %2003 = vmatmul.f32.gmra.mxu0 %v1425
        %v2004 = vpop.f32.mrf.mxu0
        %v2005 = vadd.f32 %v1940, %v2004
        %2006 = vmatmul.f32.gmra.mxu0 %v1426
        %v2007 = vpop.f32.mrf.mxu0
        %v2008 = vadd.f32 %v1943, %v2007
        %2009 = vmatmul.f32.gmra.mxu0 %v1427
        %v2010 = vpop.f32.mrf.mxu0
        %v2011 = vadd.f32 %v1946, %v2010
        %2012 = vdwg.mxu0
        %2013 = vmatpush.msra.mxu0 %v1588
        %2014 = vmatpush.msra.mxu0 %v1587
        %2015 = vmatpush.msra.mxu0 %v1586
        %2016 = vmatpush.msra.mxu0 %v1585
        %2017 = vmatpush.msra.mxu0 %v1584
        %2018 = vmatpush.msra.mxu0 %v1583
        %2019 = vmatpush.msra.mxu0 %v1582
        %2020 = vmatpush.msra.mxu0 %v1581
        %2021 = vmatpush.msra.mxu0 %v1580
        %2022 = vmatpush.msra.mxu0 %v1579
        %2023 = vmatpush.msra.mxu0 %v1578
        %2024 = vmatpush.msra.mxu0 %v1577
        %2025 = vmatpush.msra.mxu0 %v1576
        %2026 = vmatpush.msra.mxu0 %v1575
        %2027 = vmatpush.msra.mxu0 %v1574
        %2028 = vmatpush.msra.mxu0 %v1573
        %2029 = vmatmul.f32.gmra.mxu0 %v1429
        %v2030 = vpop.f32.mrf.mxu0
        %v2031 = vadd.f32 %v1966, %v2030
        %2032 = vmatmul.f32.gmra.mxu0 %v1430
        %v2033 = vpop.f32.mrf.mxu0
        %v2034 = vadd.f32 %v1969, %v2033
        %2035 = vmatmul.f32.gmra.mxu0 %v1431
        %v2036 = vpop.f32.mrf.mxu0
        %v2037 = vadd.f32 %v1972, %v2036
        %2038 = vmatmul.f32.gmra.mxu0 %v1432
        %v2039 = vpop.f32.mrf.mxu0
        %v2040 = vadd.f32 %v1975, %v2039
        %2041 = vmatmul.f32.gmra.mxu0 %v1433
        %v2042 = vpop.f32.mrf.mxu0
        %v2043 = vadd.f32 %v1978, %v2042
        %2044 = vmatmul.f32.gmra.mxu0 %v1434
        %v2045 = vpop.f32.mrf.mxu0
        %v2046 = vadd.f32 %v1981, %v2045
        %2047 = vmatmul.f32.gmra.mxu0 %v1435
        %v2048 = vpop.f32.mrf.mxu0
        %v2049 = vadd.f32 %v1984, %v2048
        %2050 = vmatmul.f32.gmra.mxu0 %v1436
        %v2051 = vpop.f32.mrf.mxu0
        %v2052 = vadd.f32 %v1987, %v2051
        %2053 = vmatmul.f32.gmra.mxu0 %v1437
        %v2054 = vpop.f32.mrf.mxu0
        %v2055 = vadd.f32 %v1990, %v2054
        %2056 = vmatmul.f32.gmra.mxu0 %v1438
        %v2057 = vpop.f32.mrf.mxu0
        %v2058 = vadd.f32 %v1993, %v2057
        %2059 = vmatmul.f32.gmra.mxu0 %v1439
        %v2060 = vpop.f32.mrf.mxu0
        %v2061 = vadd.f32 %v1996, %v2060
        %2062 = vmatmul.f32.gmra.mxu0 %v1440
        %v2063 = vpop.f32.mrf.mxu0
        %v2064 = vadd.f32 %v1999, %v2063
        %2065 = vmatmul.f32.gmra.mxu0 %v1441
        %v2066 = vpop.f32.mrf.mxu0
        %v2067 = vadd.f32 %v2002, %v2066
        %2068 = vmatmul.f32.gmra.mxu0 %v1442
        %v2069 = vpop.f32.mrf.mxu0
        %v2070 = vadd.f32 %v2005, %v2069
        %2071 = vmatmul.f32.gmra.mxu0 %v1443
        %v2072 = vpop.f32.mrf.mxu0
        %v2073 = vadd.f32 %v2008, %v2072
        %2074 = vmatmul.f32.gmra.mxu0 %v1444
        %v2075 = vpop.f32.mrf.mxu0
        %v2076 = vadd.f32 %v2011, %v2075
        %2077 = vdwg.mxu0
        %2078 = vmatpush.msra.mxu0 %v1604
        %2079 = vmatpush.msra.mxu0 %v1603
        %2080 = vmatpush.msra.mxu0 %v1602
        %2081 = vmatpush.msra.mxu0 %v1601
        %2082 = vmatpush.msra.mxu0 %v1600
        %2083 = vmatpush.msra.mxu0 %v1599
        %2084 = vmatpush.msra.mxu0 %v1598
        %2085 = vmatpush.msra.mxu0 %v1597
        %2086 = vmatpush.msra.mxu0 %v1596
        %2087 = vmatpush.msra.mxu0 %v1595
        %2088 = vmatpush.msra.mxu0 %v1594
        %2089 = vmatpush.msra.mxu0 %v1593
        %2090 = vmatpush.msra.mxu0 %v1592
        %2091 = vmatpush.msra.mxu0 %v1591
        %2092 = vmatpush.msra.mxu0 %v1590
        %2093 = vmatpush.msra.mxu0 %v1589
        %2094 = vmatmul.f32.gmra.mxu0 %v1445
        %v2095 = vpop.f32.mrf.mxu0
        %v2096 = vadd.f32 %v2031, %v2095
        %2097 = vmatmul.f32.gmra.mxu0 %v1446
        %v2098 = vpop.f32.mrf.mxu0
        %v2099 = vadd.f32 %v2034, %v2098
        %2100 = vmatmul.f32.gmra.mxu0 %v1447
        %v2101 = vpop.f32.mrf.mxu0
        %v2102 = vadd.f32 %v2037, %v2101
        %2103 = vmatmul.f32.gmra.mxu0 %v1448
        %v2104 = vpop.f32.mrf.mxu0
        %v2105 = vadd.f32 %v2040, %v2104
        %2106 = vmatmul.f32.gmra.mxu0 %v1449
        %v2107 = vpop.f32.mrf.mxu0
        %v2108 = vadd.f32 %v2043, %v2107
        %2109 = vmatmul.f32.gmra.mxu0 %v1450
        %v2110 = vpop.f32.mrf.mxu0
        %v2111 = vadd.f32 %v2046, %v2110
        %2112 = vmatmul.f32.gmra.mxu0 %v1451
        %v2113 = vpop.f32.mrf.mxu0
        %v2114 = vadd.f32 %v2049, %v2113
        %2115 = vmatmul.f32.gmra.mxu0 %v1452
        %v2116 = vpop.f32.mrf.mxu0
        %v2117 = vadd.f32 %v2052, %v2116
        %2118 = vmatmul.f32.gmra.mxu0 %v1453
        %v2119 = vpop.f32.mrf.mxu0
        %v2120 = vadd.f32 %v2055, %v2119
        %2121 = vmatmul.f32.gmra.mxu0 %v1454
        %v2122 = vpop.f32.mrf.mxu0
        %v2123 = vadd.f32 %v2058, %v2122
        %2124 = vmatmul.f32.gmra.mxu0 %v1455
        %v2125 = vpop.f32.mrf.mxu0
        %v2126 = vadd.f32 %v2061, %v2125
        %2127 = vmatmul.f32.gmra.mxu0 %v1456
        %v2128 = vpop.f32.mrf.mxu0
        %v2129 = vadd.f32 %v2064, %v2128
        %2130 = vmatmul.f32.gmra.mxu0 %v1457
        %v2131 = vpop.f32.mrf.mxu0
        %v2132 = vadd.f32 %v2067, %v2131
        %2133 = vmatmul.f32.gmra.mxu0 %v1458
        %v2134 = vpop.f32.mrf.mxu0
        %v2135 = vadd.f32 %v2070, %v2134
        %2136 = vmatmul.f32.gmra.mxu0 %v1459
        %v2137 = vpop.f32.mrf.mxu0
        %v2138 = vadd.f32 %v2073, %v2137
        %2139 = vmatmul.f32.gmra.mxu0 %v1460
        %v2140 = vpop.f32.mrf.mxu0
        %v2141 = vadd.f32 %v2076, %v2140
        %2142 = vdwg.mxu0
        %2143 = vmatpush.msra.mxu0 %v1620
        %2144 = vmatpush.msra.mxu0 %v1619
        %2145 = vmatpush.msra.mxu0 %v1618
        %2146 = vmatpush.msra.mxu0 %v1617
        %2147 = vmatpush.msra.mxu0 %v1616
        %2148 = vmatpush.msra.mxu0 %v1615
        %2149 = vmatpush.msra.mxu0 %v1614
        %2150 = vmatpush.msra.mxu0 %v1613
        %2151 = vmatpush.msra.mxu0 %v1612
        %2152 = vmatpush.msra.mxu0 %v1611
        %2153 = vmatpush.msra.mxu0 %v1610
        %2154 = vmatpush.msra.mxu0 %v1609
        %2155 = vmatpush.msra.mxu0 %v1608
        %2156 = vmatpush.msra.mxu0 %v1607
        %2157 = vmatpush.msra.mxu0 %v1606
        %2158 = vmatpush.msra.mxu0 %v1605
        %2159 = vmatmul.f32.gmra.mxu0 %v1461
        %v2160 = vpop.f32.mrf.mxu0
        %v2161 = vadd.f32 %v2096, %v2160
        %2162 = vmatmul.f32.gmra.mxu0 %v1462
        %v2163 = vpop.f32.mrf.mxu0
        %v2164 = vadd.f32 %v2099, %v2163
        %2165 = vmatmul.f32.gmra.mxu0 %v1463
        %v2166 = vpop.f32.mrf.mxu0
        %v2167 = vadd.f32 %v2102, %v2166
        %2168 = vmatmul.f32.gmra.mxu0 %v1464
        %v2169 = vpop.f32.mrf.mxu0
        %v2170 = vadd.f32 %v2105, %v2169
        %2171 = vmatmul.f32.gmra.mxu0 %v1465
        %v2172 = vpop.f32.mrf.mxu0
        %v2173 = vadd.f32 %v2108, %v2172
        %2174 = vmatmul.f32.gmra.mxu0 %v1466
        %v2175 = vpop.f32.mrf.mxu0
        %v2176 = vadd.f32 %v2111, %v2175
        %2177 = vmatmul.f32.gmra.mxu0 %v1467
        %v2178 = vpop.f32.mrf.mxu0
        %v2179 = vadd.f32 %v2114, %v2178
        %2180 = vmatmul.f32.gmra.mxu0 %v1468
        %v2181 = vpop.f32.mrf.mxu0
        %v2182 = vadd.f32 %v2117, %v2181
        %2183 = vmatmul.f32.gmra.mxu0 %v1469
        %v2184 = vpop.f32.mrf.mxu0
        %v2185 = vadd.f32 %v2120, %v2184
        %2186 = vmatmul.f32.gmra.mxu0 %v1470
        %v2187 = vpop.f32.mrf.mxu0
        %v2188 = vadd.f32 %v2123, %v2187
        %2189 = vmatmul.f32.gmra.mxu0 %v1471
        %v2190 = vpop.f32.mrf.mxu0
        %v2191 = vadd.f32 %v2126, %v2190
        %2192 = vmatmul.f32.gmra.mxu0 %v1472
        %v2193 = vpop.f32.mrf.mxu0
        %v2194 = vadd.f32 %v2129, %v2193
        %2195 = vmatmul.f32.gmra.mxu0 %v1473
        %v2196 = vpop.f32.mrf.mxu0
        %v2197 = vadd.f32 %v2132, %v2196
        %2198 = vmatmul.f32.gmra.mxu0 %v1474
        %v2199 = vpop.f32.mrf.mxu0
        %v2200 = vadd.f32 %v2135, %v2199
        %2201 = vmatmul.f32.gmra.mxu0 %v1475
        %v2202 = vpop.f32.mrf.mxu0
        %v2203 = vadd.f32 %v2138, %v2202
        %2204 = vmatmul.f32.gmra.mxu0 %v1476
        %v2205 = vpop.f32.mrf.mxu0
        %v2206 = vadd.f32 %v2141, %v2205
        %2207 = vdwg.mxu0
        %v2208 = vld [vmem:[%s356 + $0x1] sm:$0xff]
        %v2209 = vld [vmem:[%s356 + $0x9] sm:$0xff]
        %v2210 = vld [vmem:[%s356 + $0x19] sm:$0xff]
        %v2211 = vld [vmem:[%s356 + $0x21] sm:$0xff]
        %v2212 = vld [vmem:[%s356 + $0x31] sm:$0xff]
        %v2213 = vld [vmem:[%s356 + $0x39] sm:$0xff]
        %v2214 = vld [vmem:[%s356 + $0x49] sm:$0xff]
        %v2215 = vld [vmem:[%s356 + $0x51] sm:$0xff]
        %v2216 = vld [vmem:[%s356 + $0x61] sm:$0xff]
        %v2217 = vld [vmem:[%s356 + $0x69] sm:$0xff]
        %v2218 = vld [vmem:[%s356 + $0x79] sm:$0xff]
        %v2219 = vld [vmem:[%s356 + $0x81] sm:$0xff]
        %v2220 = vld [vmem:[%s356 + $0x91] sm:$0xff]
        %v2221 = vld [vmem:[%s356 + $0x99] sm:$0xff]
        %v2222 = vld [vmem:[%s356 + $0xa9] sm:$0xff]
        %v2223 = vld [vmem:[%s356 + $0xb1] sm:$0xff]
        %v2224 = vadd.f32 %v2161, %v2208
        %v2225 = vadd.f32 %v2164, %v2209
        %v2226 = vadd.f32 %v2167, %v2210
        %v2227 = vadd.f32 %v2170, %v2211
        %v2228 = vadd.f32 %v2173, %v2212
        %v2229 = vadd.f32 %v2176, %v2213
        %v2230 = vadd.f32 %v2179, %v2214
        %v2231 = vadd.f32 %v2182, %v2215
        %v2232 = vadd.f32 %v2185, %v2216
        %v2233 = vadd.f32 %v2188, %v2217
        %v2234 = vadd.f32 %v2191, %v2218
        %v2235 = vadd.f32 %v2194, %v2219
        %v2236 = vadd.f32 %v2197, %v2220
        %v2237 = vadd.f32 %v2200, %v2221
        %v2238 = vadd.f32 %v2203, %v2222
        %v2239 = vadd.f32 %v2206, %v2223
        %v2240 = vmax.f32 %v2224, 0.0
        %v2241 = vmax.f32 %v2225, 0.0
        %v2242 = vmax.f32 %v2226, 0.0
        %v2243 = vmax.f32 %v2227, 0.0
        %v2244 = vmax.f32 %v2228, 0.0
        %v2245 = vmax.f32 %v2229, 0.0
        %v2246 = vmax.f32 %v2230, 0.0
        %v2247 = vmax.f32 %v2231, 0.0
        %v2248 = vmax.f32 %v2232, 0.0
        %v2249 = vmax.f32 %v2233, 0.0
        %v2250 = vmax.f32 %v2234, 0.0
        %v2251 = vmax.f32 %v2235, 0.0
        %v2252 = vmax.f32 %v2236, 0.0
        %v2253 = vmax.f32 %v2237, 0.0
        %v2254 = vmax.f32 %v2238, 0.0
        %v2255 = vmax.f32 %v2239, 0.0
        %2256 = vst [vmem:[%s221] sm:$0xff] %v2240
        %2257 = vst [vmem:[%s221 + $0x8] sm:$0xff] %v2241
        %2258 = vst [vmem:[%s221 + $0x10] sm:$0xff] %v2242
        %2259 = vst [vmem:[%s221 + $0x18] sm:$0xff] %v2243
        %2260 = vst [vmem:[%s221 + $0x20] sm:$0xff] %v2244
        %2261 = vst [vmem:[%s221 + $0x28] sm:$0xff] %v2245
        %2262 = vst [vmem:[%s221 + $0x30] sm:$0xff] %v2246
        %2263 = vst [vmem:[%s221 + $0x38] sm:$0xff] %v2247
        %2264 = vst [vmem:[%s221 + $0x40] sm:$0xff] %v2248
        %2265 = vst [vmem:[%s221 + $0x48] sm:$0xff] %v2249
        %2266 = vst [vmem:[%s221 + $0x50] sm:$0xff] %v2250
        %2267 = vst [vmem:[%s221 + $0x58] sm:$0xff] %v2251
        %2268 = vst [vmem:[%s221 + $0x60] sm:$0xff] %v2252
        %2269 = vst [vmem:[%s221 + $0x68] sm:$0xff] %v2253
        %2270 = vst [vmem:[%s221 + $0x70] sm:$0xff] %v2254
        %2271 = vst [vmem:[%s221 + $0x78] sm:$0xff] %v2255
        %s2272 = sand.u32 %s130, 1
        %s2273 = scalar_lea.sflag [#allocation5], %s2272
        %s2274 = sand.u32 %s130, 1
        %s2275 = smul.addr %s2274, 128
        %s2276 = scalar_lea.vmem [#allocation6], %s2275
        // Predicated region
        $region49: #{tpu_custom_call.1} parent=35 // pred_check
          %p2277 = pneg %p140
        $region50: #{tpu_custom_call.1} parent=35 // pred_check_branch
          %2279 = sbr.rel (%p2277) target = $region52
        $region51: #{tpu_custom_call.1} parent=35 // pred_region
          %s2280 = smul.u32 8, %s24
          %2282 = vsyncadd %s2273, 0
          %s2283 = smul.addr %s2280, 2
          %s2284 = smul.addr %s23, 32
          %s2285 = sadd.s32 %s2283, %s2284
          %s2286 = smul.addr %s2285, 8
          %s2287 = scalar_lea.hbm %s4, %s2286
          %s2288 = sshll.u32 %s2276, 4
          %s2289 = int_to_ptr.vmem [resolvable:$true] %s2288
          %s2290 = sshll.u32 %s2287, 4
          %s2291 = int_to_ptr.hbm [resolvable:$true] %s2290
          %2296 = dma.vmem_to_hbm [thread:$0]  %s2289, 2048, %s2291, %s2273, 128, 128, 8
        $region52: #{tpu_custom_call.1} parent=35 // pred_fallthru
          _
      $region36: #{tpu_custom_call.1} parent=5 // pred_fallthru
        _
      %p2297 = scmp.le.s32.totalorder 2, %s14
      // Predicated region
      $region53: #{tpu_custom_call.1} parent=5 // pred_check
        %p2298 = pneg %p2297
      $region54: #{tpu_custom_call.1} parent=5 // pred_check_branch
        %2300 = sbr.rel (%p2298) target = $region56
      $region55: #{tpu_custom_call.1} parent=5 // pred_region
        %s2301 = ssub.s32 %s14, 2
        // Predicated region
        $region57: #{tpu_custom_call.1} parent=55 // pred_check
          %p2302 = pneg %p146
        $region58: #{tpu_custom_call.1} parent=55 // pred_check_branch
          %2304 = sbr.rel (%p2302) target = $region60
        $region59: #{tpu_custom_call.1} parent=55 // pred_region
          %s2305 = sand.u32 %s131, 1
          %s2306 = scalar_lea.sflag [#allocation5], %s2305
          %s2307 = sand.u32 %s131, 1
          %s2308 = smul.addr %s2307, 128
          %s2309 = scalar_lea.vmem [#allocation6], %s2308
          %2311 = dma.done %s2306, 2048
        $region60: #{tpu_custom_call.1} parent=55 // pred_fallthru
          _
      $region56: #{tpu_custom_call.1} parent=5 // pred_fallthru
        _
    $region6: #{tpu_custom_call.1} parent=1 // loop_footer
      %s18 = sadd.s32 1, %s14
    $region7: #{tpu_custom_call.1} parent=1 // loop_footer_branch
      %13 = sbr.rel target = $region3
    $region8: #{tpu_custom_call.1} parent=1 // loop_exit
      _
    %2312 = vsyncpa [#allocation4], 1
    %s2313 = scalar_lea.sflag [#allocation4], 1
    %2314 = vsyncpa %s2313, 1
    %2315 = vsyncpa [#allocation5], 1
    %s2316 = scalar_lea.sflag [#allocation5], 1
    %2317 = vsyncpa %s2316, 1

</llo_original>
